<compile_context>
chip_gen: v5e
topology: v5e:2x2
jax: 0.10.0
libtpu: 0.0.40
codegen_flags: <defaults>
</compile_context>

<pallas_src>
import functools

import jax
import jax.numpy as jnp
from jax.experimental import pallas as pl
from jax.experimental.pallas import tpu as pltpu


_LANE = 512              # lane-dense last dim (multiple of 128)
_SUBLANE = 8             # f32 sublane granularity
_MAX_BLOCK_ROWS = 2048   # 2048 x 512 f32 = 4 MiB per input block
_VMEM_LIMIT = 32 * 1024 * 1024
_FAST_PATH_ELEMS = 1 << 16   # below this, plain XLA wins (launch + step overhead)


@functools.lru_cache(maxsize=None)
def _is_v7x():
    try:
        kind = jax.devices()[0].device_kind.lower()
    except Exception:
        return False
    return "v7" in kind


def _linex_kernel(x_ref, t_ref, o_ref):
    j = pl.program_id(1)

    # Output block's index_map ignores j -> it stays resident across the
    # reduction axis; init once, accumulate directly into it.
    @pl.when(j == 0)
    def _():
        o_ref[...] = jnp.zeros_like(o_ref)

    a = jnp.float32(2.0)
    x = x_ref[...].astype(jnp.float32)
    t = t_ref[...].astype(jnp.float32)
    errz = jnp.abs(t) - jnp.abs(x)
    ae = a * errz
    loss = (2.0 / (a * a)) * (jnp.exp(ae) - ae - 1.0)
    # Lane-wise partial sums (sublane reduce only); the tiny cross-lane reduce
    # is deferred to jnp.sum in the wrapper.
    o_ref[0] += jnp.sum(loss, axis=0, keepdims=True)


def _linex_elementwise(x, t):
    a = jnp.float32(2.0)
    errz = jnp.abs(t.astype(jnp.float32)) - jnp.abs(x.astype(jnp.float32))
    ae = a * errz
    return (2.0 / (a * a)) * (jnp.exp(ae) - ae - 1.0)


def linex_loss(input_, target, eps=1e-6, reduction="mean"):
    """LINEX loss, semantics identical to Custom_LINEX.forward.

    Note: `eps` is accepted but unused, matching the PyTorch module.
    """
    if reduction not in ("none", "mean", "sum"):
        raise ValueError(reduction + " is not valid")

    b = input_.shape[0]
    x = input_.reshape(b, -1)
    t = target.reshape(b, -1)
    if x.shape != t.shape:
        raise ValueError("input and target must have same size")

    if reduction == "none":
        # Pure elementwise map with no reduction: plain fused XLA is optimal.
        return _linex_elementwise(x, t)

    total_n = x.size
    xf = jnp.ravel(x)
    tf = jnp.ravel(t)
    if xf.dtype != jnp.float32:
        # Sub-32-bit dtypes would need (16,128)/(32,128) minimum tiles; cast up.
        xf = xf.astype(jnp.float32)
        tf = tf.astype(jnp.float32)

    # Small-input fast path: kernel launch + per-step overhead dominates.
    if total_n < _FAST_PATH_ELEMS:
        total = jnp.sum(_linex_elementwise(xf, tf))
        return total / jnp.float32(total_n) if reduction == "mean" else total

    num_shards = 2 if _is_v7x() else 1

    # ---- Bulk/tail split: no padding, no full-array copies. ----
    # Invariant: total_n >= _FAST_PATH_ELEMS >= num_shards*_SUBLANE*_LANE, so
    # rows_per_shard >= _SUBLANE and all quantities below are positive.
    rows = total_n // _LANE
    rows_per_shard = (rows // num_shards) // _SUBLANE * _SUBLANE
    num_blocks = pl.cdiv(rows_per_shard, _MAX_BLOCK_ROWS)
    block_rows = (rows_per_shard // num_blocks) // _SUBLANE * _SUBLANE
    rows_per_shard = num_blocks * block_rows
    bulk_rows = num_shards * rows_per_shard
    bulk_n = bulk_rows * _LANE

    if bulk_n == total_n:
        xb = xf.reshape(bulk_rows, _LANE)      # zero-copy reshape
        tb = tf.reshape(bulk_rows, _LANE)
    else:
        xb = xf[:bulk_n].reshape(bulk_rows, _LANE)   # contiguous prefix
        tb = tf[:bulk_n].reshape(bulk_rows, _LANE)

    in_map = lambda c, j: (c * num_blocks + j, 0)
    spec_kwargs = {"pipeline_mode": pl.Buffered(3)} if _is_v7x() else {}
    in_spec = pl.BlockSpec((block_rows, _LANE), in_map, **spec_kwargs)

    dims = (
        pltpu.CORE_PARALLEL if num_shards > 1 else pltpu.ARBITRARY,
        pltpu.ARBITRARY,
    )

    partials = pl.pallas_call(
        _linex_kernel,
        out_shape=jax.ShapeDtypeStruct((num_shards, 1, _LANE), jnp.float32),
        grid_spec=pltpu.PrefetchScalarGridSpec(
            num_scalar_prefetch=0,
            grid=(num_shards, num_blocks),
            in_specs=[in_spec, in_spec],
            out_specs=pl.BlockSpec((1, 1, _LANE), lambda c, j: (c, 0, 0)),
        ),
        compiler_params=pltpu.CompilerParams(
            dimension_semantics=dims,
            vmem_limit_bytes=_VMEM_LIMIT,
        ),
    )(xb, tb)

    total = jnp.sum(partials)
    if bulk_n != total_n:
        # Tail (< one block-row granule worth of elements) in plain jnp.
        total = total + jnp.sum(_linex_elementwise(xf[bulk_n:], tf[bulk_n:]))

    if reduction == "mean":
        return total / jnp.float32(total_n)
    return total


def _linex_ref(input_, target, reduction="mean"):
    b = input_.shape[0]
    x = input_.reshape(b, -1).astype(jnp.float32)
    t = target.reshape(b, -1).astype(jnp.float32)
    a = 2.0
    errz = jnp.abs(t) - jnp.abs(x)
    loss = 2.0 / (a * a) * (jnp.exp(a * errz) - a * errz - 1.0)
    if reduction == "mean":
        return loss.mean()
    if reduction == "sum":
        return loss.sum()
    return loss


if __name__ == "__main__":
    key = jax.random.PRNGKey(0)
    k1, k2, k3, k4, k5, k6 = jax.random.split(key, 6)

    # 1) Kernel path, divisible bulk (zero-copy layout): NCHW (2, 4, 128, 128).
    x = jax.random.normal(k1, (2, 4, 128, 128), dtype=jnp.float32) * 0.5
    t = jax.random.normal(k2, (2, 4, 128, 128), dtype=jnp.float32) * 0.5
    out_mean = jax.block_until_ready(linex_loss(x, t, reduction="mean"))
    out_sum = jax.block_until_ready(linex_loss(x, t, reduction="sum"))
    assert jnp.allclose(out_mean, _linex_ref(x, t, "mean"), rtol=1e-4, atol=1e-6)
    assert jnp.allclose(out_sum, _linex_ref(x, t, "sum"), rtol=1e-4, atol=1e-2)

    # 2) Kernel path with a non-divisible tail: (2, 3, 100, 129) = 77400 elems.
    x2 = jax.random.normal(k3, (2, 3, 100, 129), dtype=jnp.float32) * 0.5
    t2 = jax.random.normal(k4, (2, 3, 100, 129), dtype=jnp.float32) * 0.5
    out2 = jax.block_until_ready(linex_loss(x2, t2, reduction="mean"))
    assert jnp.allclose(out2, _linex_ref(x2, t2, "mean"), rtol=1e-4, atol=1e-6)

    # 3) Small-input fast path + reduction='none': NCHW (2, 4, 16, 16).
    x3 = jax.random.normal(k5, (2, 4, 16, 16), dtype=jnp.float32) * 0.5
    t3 = jax.random.normal(k6, (2, 4, 16, 16), dtype=jnp.float32) * 0.5
    out3 = jax.block_until_ready(linex_loss(x3, t3, reduction="mean"))
    assert jnp.allclose(out3, _linex_ref(x3, t3, "mean"), rtol=1e-5, atol=1e-6)
    out3n = jax.block_until_ready(linex_loss(x3, t3, reduction="none"))
    assert jnp.allclose(out3n, _linex_ref(x3, t3, "none"), rtol=1e-5, atol=1e-6)

    print("KERNEL_OK")
</pallas_src>

<mosaic_0001>
module attributes {stable_mosaic.version = 11 : i64} {
  func.func @_linex_kernel(%arg0: i32, %arg1: i32, %arg2: memref<256x512xf32, #tpu.memory_space<vmem>>, %arg3: memref<256x512xf32, #tpu.memory_space<vmem>>, %arg4: memref<1x1x512xf32, #tpu.memory_space<vmem>>) attributes {dimension_semantics = [#tpu.dimension_semantics<arbitrary>, #tpu.dimension_semantics<arbitrary>], iteration_bounds = array<i64: 1, 1>, scalar_prefetch = 0 : i64, scratch_operands = 0 : i64, tpu.core_type = #tpu.core_type<tc>, window_params = [{transform_indices = @transform_0, window_bounds = array<i64: 256, 512>}, {transform_indices = @transform_1, window_bounds = array<i64: 256, 512>}, {transform_indices = @transform_2, window_bounds = array<i64: 1, 1, 512>}]} {
    %c0_i32 = arith.constant 0 : i32
    %0 = arith.cmpi eq, %arg1, %c0_i32 : i32
    %1 = arith.extui %0 : i1 to i32
    %c0_i32_0 = arith.constant 0 : i32
    %2 = arith.cmpi ne, %1, %c0_i32_0 : i32
    scf.if %2 {
      %cst_15 = arith.constant 0.000000e+00 : f32
      %26 = vector.broadcast %cst_15 : f32 to vector<1x1x512xf32>
      %c0_16 = arith.constant 0 : index
      %c0_17 = arith.constant 0 : index
      %c0_18 = arith.constant 0 : index
      %27 = vector.load %arg4[%c0_16, %c0_17, %c0_18] : memref<1x1x512xf32, #tpu.memory_space<vmem>>, vector<1x1x512xf32>
      tpu.vector_store %arg4[%c0_16, %c0_17, %c0_18], %26 {strides = array<i32>} : memref<1x1x512xf32, #tpu.memory_space<vmem>>, vector<1x1x512xf32>,
    } else {
    }
    %c0 = arith.constant 0 : index
    %c0_1 = arith.constant 0 : index
    %3 = vector.load %arg2[%c0, %c0_1] : memref<256x512xf32, #tpu.memory_space<vmem>>, vector<256x512xf32>
    %c0_2 = arith.constant 0 : index
    %c0_3 = arith.constant 0 : index
    %4 = vector.load %arg3[%c0_2, %c0_3] : memref<256x512xf32, #tpu.memory_space<vmem>>, vector<256x512xf32>
    %5 = math.absf %4 : vector<256x512xf32>
    %6 = math.absf %3 : vector<256x512xf32>
    %7 = arith.subf %5, %6 : vector<256x512xf32>
    %cst = arith.constant 2.000000e+00 : f32
    %8 = vector.broadcast %cst : f32 to vector<256x512xf32>
    %9 = arith.mulf %8, %7 : vector<256x512xf32>
    %cst_4 = arith.constant 2.000000e+00 : f32
    %cst_5 = arith.constant 2.000000e+00 : f32
    %10 = arith.mulf %cst_4, %cst_5 : f32
    %cst_6 = arith.constant 2.000000e+00 : f32
    %11 = arith.divf %cst_6, %10 : f32
    %12 = math.exp %9 : vector<256x512xf32>
    %13 = arith.subf %12, %9 : vector<256x512xf32>
    %cst_7 = arith.constant 1.000000e+00 : f32
    %14 = vector.broadcast %cst_7 : f32 to vector<256x512xf32>
    %15 = arith.subf %13, %14 : vector<256x512xf32>
    %16 = vector.broadcast %11 : f32 to vector<256x512xf32>
    %17 = arith.mulf %16, %15 : vector<256x512xf32>
    %c0_8 = arith.constant 0 : index
    %c0_9 = arith.constant 0 : index
    %c0_10 = arith.constant 0 : index
    %18 = vector.load %arg4[%c0_8, %c0_9, %c0_10] : memref<1x1x512xf32, #tpu.memory_space<vmem>>, vector<1x1x512xf32>
    %19 = vector.shape_cast %18 : vector<1x1x512xf32> to vector<1x512xf32>
    %cst_11 = arith.constant dense<0.000000e+00> : vector<512xf32>
    %20 = vector.multi_reduction <add>, %17, %cst_11 [0] : vector<256x512xf32> to vector<512xf32>
    %21 = vector.shape_cast %20 : vector<512xf32> to vector<1x512xf32>
    %22 = arith.addf %19, %21 : vector<1x512xf32>
    %c0_12 = arith.constant 0 : index
    %c0_13 = arith.constant 0 : index
    %c0_14 = arith.constant 0 : index
    %23 = vector.load %arg4[%c0_12, %c0_13, %c0_14] : memref<1x1x512xf32, #tpu.memory_space<vmem>>, vector<1x1x512xf32>
    %24 = vector.shape_cast %23 : vector<1x1x512xf32> to vector<1x512xf32>
    %25 = vector.shape_cast %22 : vector<1x512xf32> to vector<1x1x512xf32>
    tpu.vector_store %arg4[%c0_12, %c0_13, %c0_14], %25 {strides = array<i32>} : memref<1x1x512xf32, #tpu.memory_space<vmem>>, vector<1x1x512xf32>,
    return
  }
  func.func @transform_0(%arg0: i32, %arg1: i32) -> (i32, i32) {
    %c1_i32 = arith.constant 1 : i32
    %0 = arith.muli %arg0, %c1_i32 : i32
    %1 = arith.addi %0, %arg1 : i32
    %c0_i32 = arith.constant 0 : i32
    %c0_i32_0 = arith.constant 0 : i32
    return %1, %c0_i32 : i32, i32
  }
  func.func @transform_1(%arg0: i32, %arg1: i32) -> (i32, i32) {
    %c1_i32 = arith.constant 1 : i32
    %0 = arith.muli %arg0, %c1_i32 : i32
    %1 = arith.addi %0, %arg1 : i32
    %c0_i32 = arith.constant 0 : i32
    %c0_i32_0 = arith.constant 0 : i32
    return %1, %c0_i32 : i32, i32
  }
  func.func @transform_2(%arg0: i32, %arg1: i32) -> (i32, i32, i32) {
    %c0_i32 = arith.constant 0 : i32
    %c0_i32_0 = arith.constant 0 : i32
    %c0_i32_1 = arith.constant 0 : i32
    return %arg0, %c0_i32, %c0_i32_0 : i32, i32, i32
  }
}

</mosaic_0001>

<llo_original>
// kernel: tpu_custom_call.1
$region0: #{tpu_custom_call.1}
  #allocation0 [shape = 'u32[]', space=smem, size = 0x4, offset = 0x4, fixed_abs, tag = 'smem constant byte address 0x4 - core index']
  #allocation1 [shape = 'u32[72,128]{1,0:T(1,128)}', space=vmem, size = 0x9000, scoped, tag = 'internal scratch']
  %s0 = inlined_call_operand.hbm [shape: f32[256,512], index: 0, kind: input, shape index: {}]
  %s1 = inlined_call_operand.hbm [shape: f32[256,512], index: 1, kind: input, shape index: {}]
  %s2 = inlined_call_operand.hbm [shape: f32[1,1,512], index: 2, kind: output, shape index: {}]
  %s3 = sld [smem:[#allocation0]]
  $region30: #{tpu_custom_call.1} parent=0
    _
  %s5 = ssub.s32 1, %s3
  %s6 = scalar_select 0, %s5, %s3
  $region1: #{tpu_custom_call.1} parent=0
    #allocation2 [shape = 'u8[524288]{0}', space=vmem, size = 0x80000, scoped, tag = 'input window, operand 0, single buffered']
    #allocation3 [shape = 's32[1]{0}', space=sflag, size = 0x4, scoped, tag = 'scoped memory for tpu_custom_call.1']
    #allocation4 [shape = 's32[1]{0}', space=sflag, size = 0x4, scoped, tag = 'scoped memory for tpu_custom_call.1']
    #allocation5 [shape = 'u8[524288]{0}', space=vmem, size = 0x80000, scoped, tag = 'input window, operand 1, single buffered']
    #allocation6 [shape = 's32[1]{0}', space=sflag, size = 0x4, scoped, tag = 'scoped memory for tpu_custom_call.1']
    #allocation7 [shape = 'u8[2048]{0}', space=vmem, size = 0x800, scoped, tag = 'output window, operand 0, single buffered']
    %7 = vsyncpa [#allocation3], 0
    %8 = vsyncpa [#allocation6], 0
    %9 = vsyncpa [#allocation4], 0
    // Predicated region
    $region2: #{tpu_custom_call.1} parent=1 // pred_check
      _
    $region3: #{tpu_custom_call.1} parent=1 // pred_check_branch
      %11 = sbr.rel (0) target = $region5
    $region4: #{tpu_custom_call.1} parent=1 // pred_region
      %s12 = sadd.s32 0, 0
      %s13 = smul.u32 32, %s12
      %15 = vsyncadd [#allocation3], 0
      %s16 = smul.addr %s13, 4
      %s17 = smul.addr %s16, 8
      %s18 = scalar_lea.hbm %s0, %s17
      %s19 = sshll.u32 %s18, 4
      %s20 = int_to_ptr.hbm [resolvable:$true] %s19
      %s21 = sshll.u32 [#allocation2], 4
      %s22 = int_to_ptr.vmem [resolvable:$true] %s21
      %27 = dma.hbm_to_vmem [thread:$0]  %s20, 16384, %s22, [#allocation3], 512, 512, 32
    $region5: #{tpu_custom_call.1} parent=1 // pred_fallthru
      _
    // Predicated region
    $region6: #{tpu_custom_call.1} parent=1 // pred_check
      _
    $region7: #{tpu_custom_call.1} parent=1 // pred_check_branch
      %29 = sbr.rel (0) target = $region9
    $region8: #{tpu_custom_call.1} parent=1 // pred_region
      %s30 = sadd.s32 0, 0
      %s31 = smul.u32 32, %s30
      %33 = vsyncadd [#allocation6], 0
      %s34 = smul.addr %s31, 4
      %s35 = smul.addr %s34, 8
      %s36 = scalar_lea.hbm %s1, %s35
      %s37 = sshll.u32 %s36, 4
      %s38 = int_to_ptr.hbm [resolvable:$true] %s37
      %s39 = sshll.u32 [#allocation5], 4
      %s40 = int_to_ptr.vmem [resolvable:$true] %s39
      %45 = dma.hbm_to_vmem [thread:$0]  %s38, 16384, %s40, [#allocation6], 512, 512, 32
    $region9: #{tpu_custom_call.1} parent=1 // pred_fallthru
      _
    // Predicated region
    $region10: #{tpu_custom_call.1} parent=1 // pred_check
      _
    $region11: #{tpu_custom_call.1} parent=1 // pred_check_branch
      %47 = sbr.rel (0) target = $region13
    $region12: #{tpu_custom_call.1} parent=1 // pred_region
      %49 = dma.done [#allocation3], 16384
    $region13: #{tpu_custom_call.1} parent=1 // pred_fallthru
      _
    // Predicated region
    $region14: #{tpu_custom_call.1} parent=1 // pred_check
      _
    $region15: #{tpu_custom_call.1} parent=1 // pred_check_branch
      %51 = sbr.rel (0) target = $region17
    $region16: #{tpu_custom_call.1} parent=1 // pred_region
      %53 = dma.done [#allocation6], 16384
    $region17: #{tpu_custom_call.1} parent=1 // pred_fallthru
      _
    %s54 = sadd.s32 0, 0
    %s55 = smul.u32 32, %s54
    %s56 = sadd.s32 0, 0
    %s57 = smul.u32 32, %s56
    %p58 = scmp.eq.s32.totalorder 0, 0
    // Predicated region
    $region18: #{tpu_custom_call.1} parent=1 // pred_check
      %p59 = pneg %p58
    $region19: #{tpu_custom_call.1} parent=1 // pred_check_branch
      %61 = sbr.rel (%p59) target = $region21
    $region20: #{tpu_custom_call.1} parent=1 // pred_region
      %v62 = vlaneseq
      %vm63 = vcmp.ge.s32.totalorder %v62, 0
      %vm64 = vcmp.lt.s32.totalorder %v62, 512
      %vm65 = vmand %vm63, %vm64
      %66 = vst.msk [vmem:[#allocation7] sm:$0xf] %vm65, 0.0
    $region21: #{tpu_custom_call.1} parent=1 // pred_fallthru
      _
    %v67 = vld [vmem:[#allocation2] sm:$0xff]
    %v68 = vld [vmem:[#allocation2 + $0x8] sm:$0xff]
    %v69 = vld [vmem:[#allocation2 + $0x10] sm:$0xff]
    %v70 = vld [vmem:[#allocation2 + $0x18] sm:$0xff]
    %v71 = vld [vmem:[#allocation2 + $0x20] sm:$0xff]
    %v72 = vld [vmem:[#allocation2 + $0x28] sm:$0xff]
    %v73 = vld [vmem:[#allocation2 + $0x30] sm:$0xff]
    %v74 = vld [vmem:[#allocation2 + $0x38] sm:$0xff]
    %v75 = vld [vmem:[#allocation2 + $0x40] sm:$0xff]
    %v76 = vld [vmem:[#allocation2 + $0x48] sm:$0xff]
    %v77 = vld [vmem:[#allocation2 + $0x50] sm:$0xff]
    %v78 = vld [vmem:[#allocation2 + $0x58] sm:$0xff]
    %v79 = vld [vmem:[#allocation2 + $0x60] sm:$0xff]
    %v80 = vld [vmem:[#allocation2 + $0x68] sm:$0xff]
    %v81 = vld [vmem:[#allocation2 + $0x70] sm:$0xff]
    %v82 = vld [vmem:[#allocation2 + $0x78] sm:$0xff]
    %v83 = vld [vmem:[#allocation2 + $0x80] sm:$0xff]
    %v84 = vld [vmem:[#allocation2 + $0x88] sm:$0xff]
    %v85 = vld [vmem:[#allocation2 + $0x90] sm:$0xff]
    %v86 = vld [vmem:[#allocation2 + $0x98] sm:$0xff]
    %v87 = vld [vmem:[#allocation2 + $0xa0] sm:$0xff]
    %v88 = vld [vmem:[#allocation2 + $0xa8] sm:$0xff]
    %v89 = vld [vmem:[#allocation2 + $0xb0] sm:$0xff]
    %v90 = vld [vmem:[#allocation2 + $0xb8] sm:$0xff]
    %v91 = vld [vmem:[#allocation2 + $0xc0] sm:$0xff]
    %v92 = vld [vmem:[#allocation2 + $0xc8] sm:$0xff]
    %v93 = vld [vmem:[#allocation2 + $0xd0] sm:$0xff]
    %v94 = vld [vmem:[#allocation2 + $0xd8] sm:$0xff]
    %v95 = vld [vmem:[#allocation2 + $0xe0] sm:$0xff]
    %v96 = vld [vmem:[#allocation2 + $0xe8] sm:$0xff]
    %v97 = vld [vmem:[#allocation2 + $0xf0] sm:$0xff]
    %v98 = vld [vmem:[#allocation2 + $0xf8] sm:$0xff]
    %v99 = vld [vmem:[#allocation2 + $0x100] sm:$0xff]
    %v100 = vld [vmem:[#allocation2 + $0x108] sm:$0xff]
    %v101 = vld [vmem:[#allocation2 + $0x110] sm:$0xff]
    %v102 = vld [vmem:[#allocation2 + $0x118] sm:$0xff]
    %v103 = vld [vmem:[#allocation2 + $0x120] sm:$0xff]
    %v104 = vld [vmem:[#allocation2 + $0x128] sm:$0xff]
    %v105 = vld [vmem:[#allocation2 + $0x130] sm:$0xff]
    %v106 = vld [vmem:[#allocation2 + $0x138] sm:$0xff]
    %v107 = vld [vmem:[#allocation2 + $0x140] sm:$0xff]
    %v108 = vld [vmem:[#allocation2 + $0x148] sm:$0xff]
    %v109 = vld [vmem:[#allocation2 + $0x150] sm:$0xff]
    %v110 = vld [vmem:[#allocation2 + $0x158] sm:$0xff]
    %v111 = vld [vmem:[#allocation2 + $0x160] sm:$0xff]
    %v112 = vld [vmem:[#allocation2 + $0x168] sm:$0xff]
    %v113 = vld [vmem:[#allocation2 + $0x170] sm:$0xff]
    %v114 = vld [vmem:[#allocation2 + $0x178] sm:$0xff]
    %v115 = vld [vmem:[#allocation2 + $0x180] sm:$0xff]
    %v116 = vld [vmem:[#allocation2 + $0x188] sm:$0xff]
    %v117 = vld [vmem:[#allocation2 + $0x190] sm:$0xff]
    %v118 = vld [vmem:[#allocation2 + $0x198] sm:$0xff]
    %v119 = vld [vmem:[#allocation2 + $0x1a0] sm:$0xff]
    %v120 = vld [vmem:[#allocation2 + $0x1a8] sm:$0xff]
    %v121 = vld [vmem:[#allocation2 + $0x1b0] sm:$0xff]
    %v122 = vld [vmem:[#allocation2 + $0x1b8] sm:$0xff]
    %v123 = vld [vmem:[#allocation2 + $0x1c0] sm:$0xff]
    %v124 = vld [vmem:[#allocation2 + $0x1c8] sm:$0xff]
    %v125 = vld [vmem:[#allocation2 + $0x1d0] sm:$0xff]
    %v126 = vld [vmem:[#allocation2 + $0x1d8] sm:$0xff]
    %v127 = vld [vmem:[#allocation2 + $0x1e0] sm:$0xff]
    %v128 = vld [vmem:[#allocation2 + $0x1e8] sm:$0xff]
    %v129 = vld [vmem:[#allocation2 + $0x1f0] sm:$0xff]
    %v130 = vld [vmem:[#allocation2 + $0x1f8] sm:$0xff]
    %v131 = vld [vmem:[#allocation2 + $0x200] sm:$0xff]
    %v132 = vld [vmem:[#allocation2 + $0x208] sm:$0xff]
    %v133 = vld [vmem:[#allocation2 + $0x210] sm:$0xff]
    %v134 = vld [vmem:[#allocation2 + $0x218] sm:$0xff]
    %v135 = vld [vmem:[#allocation2 + $0x220] sm:$0xff]
    %v136 = vld [vmem:[#allocation2 + $0x228] sm:$0xff]
    %v137 = vld [vmem:[#allocation2 + $0x230] sm:$0xff]
    %v138 = vld [vmem:[#allocation2 + $0x238] sm:$0xff]
    %v139 = vld [vmem:[#allocation2 + $0x240] sm:$0xff]
    %v140 = vld [vmem:[#allocation2 + $0x248] sm:$0xff]
    %v141 = vld [vmem:[#allocation2 + $0x250] sm:$0xff]
    %v142 = vld [vmem:[#allocation2 + $0x258] sm:$0xff]
    %v143 = vld [vmem:[#allocation2 + $0x260] sm:$0xff]
    %v144 = vld [vmem:[#allocation2 + $0x268] sm:$0xff]
    %v145 = vld [vmem:[#allocation2 + $0x270] sm:$0xff]
    %v146 = vld [vmem:[#allocation2 + $0x278] sm:$0xff]
    %v147 = vld [vmem:[#allocation2 + $0x280] sm:$0xff]
    %v148 = vld [vmem:[#allocation2 + $0x288] sm:$0xff]
    %v149 = vld [vmem:[#allocation2 + $0x290] sm:$0xff]
    %v150 = vld [vmem:[#allocation2 + $0x298] sm:$0xff]
    %v151 = vld [vmem:[#allocation2 + $0x2a0] sm:$0xff]
    %v152 = vld [vmem:[#allocation2 + $0x2a8] sm:$0xff]
    %v153 = vld [vmem:[#allocation2 + $0x2b0] sm:$0xff]
    %v154 = vld [vmem:[#allocation2 + $0x2b8] sm:$0xff]
    %v155 = vld [vmem:[#allocation2 + $0x2c0] sm:$0xff]
    %v156 = vld [vmem:[#allocation2 + $0x2c8] sm:$0xff]
    %v157 = vld [vmem:[#allocation2 + $0x2d0] sm:$0xff]
    %v158 = vld [vmem:[#allocation2 + $0x2d8] sm:$0xff]
    %v159 = vld [vmem:[#allocation2 + $0x2e0] sm:$0xff]
    %v160 = vld [vmem:[#allocation2 + $0x2e8] sm:$0xff]
    %v161 = vld [vmem:[#allocation2 + $0x2f0] sm:$0xff]
    %v162 = vld [vmem:[#allocation2 + $0x2f8] sm:$0xff]
    %v163 = vld [vmem:[#allocation2 + $0x300] sm:$0xff]
    %v164 = vld [vmem:[#allocation2 + $0x308] sm:$0xff]
    %v165 = vld [vmem:[#allocation2 + $0x310] sm:$0xff]
    %v166 = vld [vmem:[#allocation2 + $0x318] sm:$0xff]
    %v167 = vld [vmem:[#allocation2 + $0x320] sm:$0xff]
    %v168 = vld [vmem:[#allocation2 + $0x328] sm:$0xff]
    %v169 = vld [vmem:[#allocation2 + $0x330] sm:$0xff]
    %v170 = vld [vmem:[#allocation2 + $0x338] sm:$0xff]
    %v171 = vld [vmem:[#allocation2 + $0x340] sm:$0xff]
    %v172 = vld [vmem:[#allocation2 + $0x348] sm:$0xff]
    %v173 = vld [vmem:[#allocation2 + $0x350] sm:$0xff]
    %v174 = vld [vmem:[#allocation2 + $0x358] sm:$0xff]
    %v175 = vld [vmem:[#allocation2 + $0x360] sm:$0xff]
    %v176 = vld [vmem:[#allocation2 + $0x368] sm:$0xff]
    %v177 = vld [vmem:[#allocation2 + $0x370] sm:$0xff]
    %v178 = vld [vmem:[#allocation2 + $0x378] sm:$0xff]
    %v179 = vld [vmem:[#allocation2 + $0x380] sm:$0xff]
    %v180 = vld [vmem:[#allocation2 + $0x388] sm:$0xff]
    %v181 = vld [vmem:[#allocation2 + $0x390] sm:$0xff]
    %v182 = vld [vmem:[#allocation2 + $0x398] sm:$0xff]
    %v183 = vld [vmem:[#allocation2 + $0x3a0] sm:$0xff]
    %v184 = vld [vmem:[#allocation2 + $0x3a8] sm:$0xff]
    %v185 = vld [vmem:[#allocation2 + $0x3b0] sm:$0xff]
    %v186 = vld [vmem:[#allocation2 + $0x3b8] sm:$0xff]
    %v187 = vld [vmem:[#allocation2 + $0x3c0] sm:$0xff]
    %v188 = vld [vmem:[#allocation2 + $0x3c8] sm:$0xff]
    %v189 = vld [vmem:[#allocation2 + $0x3d0] sm:$0xff]
    %v190 = vld [vmem:[#allocation2 + $0x3d8] sm:$0xff]
    %v191 = vld [vmem:[#allocation2 + $0x3e0] sm:$0xff]
    %v192 = vld [vmem:[#allocation2 + $0x3e8] sm:$0xff]
    %v193 = vld [vmem:[#allocation2 + $0x3f0] sm:$0xff]
    %v194 = vld [vmem:[#allocation2 + $0x3f8] sm:$0xff]
    %v195 = vld [vmem:[#allocation5] sm:$0xff]
    %v196 = vld [vmem:[#allocation5 + $0x8] sm:$0xff]
    %v197 = vld [vmem:[#allocation5 + $0x10] sm:$0xff]
    %v198 = vld [vmem:[#allocation5 + $0x18] sm:$0xff]
    %v199 = vld [vmem:[#allocation5 + $0x20] sm:$0xff]
    %v200 = vld [vmem:[#allocation5 + $0x28] sm:$0xff]
    %v201 = vld [vmem:[#allocation5 + $0x30] sm:$0xff]
    %v202 = vld [vmem:[#allocation5 + $0x38] sm:$0xff]
    %v203 = vld [vmem:[#allocation5 + $0x40] sm:$0xff]
    %v204 = vld [vmem:[#allocation5 + $0x48] sm:$0xff]
    %v205 = vld [vmem:[#allocation5 + $0x50] sm:$0xff]
    %v206 = vld [vmem:[#allocation5 + $0x58] sm:$0xff]
    %v207 = vld [vmem:[#allocation5 + $0x60] sm:$0xff]
    %v208 = vld [vmem:[#allocation5 + $0x68] sm:$0xff]
    %v209 = vld [vmem:[#allocation5 + $0x70] sm:$0xff]
    %v210 = vld [vmem:[#allocation5 + $0x78] sm:$0xff]
    %v211 = vld [vmem:[#allocation5 + $0x80] sm:$0xff]
    %v212 = vld [vmem:[#allocation5 + $0x88] sm:$0xff]
    %v213 = vld [vmem:[#allocation5 + $0x90] sm:$0xff]
    %v214 = vld [vmem:[#allocation5 + $0x98] sm:$0xff]
    %v215 = vld [vmem:[#allocation5 + $0xa0] sm:$0xff]
    %v216 = vld [vmem:[#allocation5 + $0xa8] sm:$0xff]
    %v217 = vld [vmem:[#allocation5 + $0xb0] sm:$0xff]
    %v218 = vld [vmem:[#allocation5 + $0xb8] sm:$0xff]
    %v219 = vld [vmem:[#allocation5 + $0xc0] sm:$0xff]
    %v220 = vld [vmem:[#allocation5 + $0xc8] sm:$0xff]
    %v221 = vld [vmem:[#allocation5 + $0xd0] sm:$0xff]
    %v222 = vld [vmem:[#allocation5 + $0xd8] sm:$0xff]
    %v223 = vld [vmem:[#allocation5 + $0xe0] sm:$0xff]
    %v224 = vld [vmem:[#allocation5 + $0xe8] sm:$0xff]
    %v225 = vld [vmem:[#allocation5 + $0xf0] sm:$0xff]
    %v226 = vld [vmem:[#allocation5 + $0xf8] sm:$0xff]
    %v227 = vld [vmem:[#allocation5 + $0x100] sm:$0xff]
    %v228 = vld [vmem:[#allocation5 + $0x108] sm:$0xff]
    %v229 = vld [vmem:[#allocation5 + $0x110] sm:$0xff]
    %v230 = vld [vmem:[#allocation5 + $0x118] sm:$0xff]
    %v231 = vld [vmem:[#allocation5 + $0x120] sm:$0xff]
    %v232 = vld [vmem:[#allocation5 + $0x128] sm:$0xff]
    %v233 = vld [vmem:[#allocation5 + $0x130] sm:$0xff]
    %v234 = vld [vmem:[#allocation5 + $0x138] sm:$0xff]
    %v235 = vld [vmem:[#allocation5 + $0x140] sm:$0xff]
    %v236 = vld [vmem:[#allocation5 + $0x148] sm:$0xff]
    %v237 = vld [vmem:[#allocation5 + $0x150] sm:$0xff]
    %v238 = vld [vmem:[#allocation5 + $0x158] sm:$0xff]
    %v239 = vld [vmem:[#allocation5 + $0x160] sm:$0xff]
    %v240 = vld [vmem:[#allocation5 + $0x168] sm:$0xff]
    %v241 = vld [vmem:[#allocation5 + $0x170] sm:$0xff]
    %v242 = vld [vmem:[#allocation5 + $0x178] sm:$0xff]
    %v243 = vld [vmem:[#allocation5 + $0x180] sm:$0xff]
    %v244 = vld [vmem:[#allocation5 + $0x188] sm:$0xff]
    %v245 = vld [vmem:[#allocation5 + $0x190] sm:$0xff]
    %v246 = vld [vmem:[#allocation5 + $0x198] sm:$0xff]
    %v247 = vld [vmem:[#allocation5 + $0x1a0] sm:$0xff]
    %v248 = vld [vmem:[#allocation5 + $0x1a8] sm:$0xff]
    %v249 = vld [vmem:[#allocation5 + $0x1b0] sm:$0xff]
    %v250 = vld [vmem:[#allocation5 + $0x1b8] sm:$0xff]
    %v251 = vld [vmem:[#allocation5 + $0x1c0] sm:$0xff]
    %v252 = vld [vmem:[#allocation5 + $0x1c8] sm:$0xff]
    %v253 = vld [vmem:[#allocation5 + $0x1d0] sm:$0xff]
    %v254 = vld [vmem:[#allocation5 + $0x1d8] sm:$0xff]
    %v255 = vld [vmem:[#allocation5 + $0x1e0] sm:$0xff]
    %v256 = vld [vmem:[#allocation5 + $0x1e8] sm:$0xff]
    %v257 = vld [vmem:[#allocation5 + $0x1f0] sm:$0xff]
    %v258 = vld [vmem:[#allocation5 + $0x1f8] sm:$0xff]
    %v259 = vld [vmem:[#allocation5 + $0x200] sm:$0xff]
    %v260 = vld [vmem:[#allocation5 + $0x208] sm:$0xff]
    %v261 = vld [vmem:[#allocation5 + $0x210] sm:$0xff]
    %v262 = vld [vmem:[#allocation5 + $0x218] sm:$0xff]
    %v263 = vld [vmem:[#allocation5 + $0x220] sm:$0xff]
    %v264 = vld [vmem:[#allocation5 + $0x228] sm:$0xff]
    %v265 = vld [vmem:[#allocation5 + $0x230] sm:$0xff]
    %v266 = vld [vmem:[#allocation5 + $0x238] sm:$0xff]
    %v267 = vld [vmem:[#allocation5 + $0x240] sm:$0xff]
    %v268 = vld [vmem:[#allocation5 + $0x248] sm:$0xff]
    %v269 = vld [vmem:[#allocation5 + $0x250] sm:$0xff]
    %v270 = vld [vmem:[#allocation5 + $0x258] sm:$0xff]
    %v271 = vld [vmem:[#allocation5 + $0x260] sm:$0xff]
    %v272 = vld [vmem:[#allocation5 + $0x268] sm:$0xff]
    %v273 = vld [vmem:[#allocation5 + $0x270] sm:$0xff]
    %v274 = vld [vmem:[#allocation5 + $0x278] sm:$0xff]
    %v275 = vld [vmem:[#allocation5 + $0x280] sm:$0xff]
    %v276 = vld [vmem:[#allocation5 + $0x288] sm:$0xff]
    %v277 = vld [vmem:[#allocation5 + $0x290] sm:$0xff]
    %v278 = vld [vmem:[#allocation5 + $0x298] sm:$0xff]
    %v279 = vld [vmem:[#allocation5 + $0x2a0] sm:$0xff]
    %v280 = vld [vmem:[#allocation5 + $0x2a8] sm:$0xff]
    %v281 = vld [vmem:[#allocation5 + $0x2b0] sm:$0xff]
    %v282 = vld [vmem:[#allocation5 + $0x2b8] sm:$0xff]
    %v283 = vld [vmem:[#allocation5 + $0x2c0] sm:$0xff]
    %v284 = vld [vmem:[#allocation5 + $0x2c8] sm:$0xff]
    %v285 = vld [vmem:[#allocation5 + $0x2d0] sm:$0xff]
    %v286 = vld [vmem:[#allocation5 + $0x2d8] sm:$0xff]
    %v287 = vld [vmem:[#allocation5 + $0x2e0] sm:$0xff]
    %v288 = vld [vmem:[#allocation5 + $0x2e8] sm:$0xff]
    %v289 = vld [vmem:[#allocation5 + $0x2f0] sm:$0xff]
    %v290 = vld [vmem:[#allocation5 + $0x2f8] sm:$0xff]
    %v291 = vld [vmem:[#allocation5 + $0x300] sm:$0xff]
    %v292 = vld [vmem:[#allocation5 + $0x308] sm:$0xff]
    %v293 = vld [vmem:[#allocation5 + $0x310] sm:$0xff]
    %v294 = vld [vmem:[#allocation5 + $0x318] sm:$0xff]
    %v295 = vld [vmem:[#allocation5 + $0x320] sm:$0xff]
    %v296 = vld [vmem:[#allocation5 + $0x328] sm:$0xff]
    %v297 = vld [vmem:[#allocation5 + $0x330] sm:$0xff]
    %v298 = vld [vmem:[#allocation5 + $0x338] sm:$0xff]
    %v299 = vld [vmem:[#allocation5 + $0x340] sm:$0xff]
    %v300 = vld [vmem:[#allocation5 + $0x348] sm:$0xff]
    %v301 = vld [vmem:[#allocation5 + $0x350] sm:$0xff]
    %v302 = vld [vmem:[#allocation5 + $0x358] sm:$0xff]
    %v303 = vld [vmem:[#allocation5 + $0x360] sm:$0xff]
    %v304 = vld [vmem:[#allocation5 + $0x368] sm:$0xff]
    %v305 = vld [vmem:[#allocation5 + $0x370] sm:$0xff]
    %v306 = vld [vmem:[#allocation5 + $0x378] sm:$0xff]
    %v307 = vld [vmem:[#allocation5 + $0x380] sm:$0xff]
    %v308 = vld [vmem:[#allocation5 + $0x388] sm:$0xff]
    %v309 = vld [vmem:[#allocation5 + $0x390] sm:$0xff]
    %v310 = vld [vmem:[#allocation5 + $0x398] sm:$0xff]
    %v311 = vld [vmem:[#allocation5 + $0x3a0] sm:$0xff]
    %v312 = vld [vmem:[#allocation5 + $0x3a8] sm:$0xff]
    %v313 = vld [vmem:[#allocation5 + $0x3b0] sm:$0xff]
    %v314 = vld [vmem:[#allocation5 + $0x3b8] sm:$0xff]
    %v315 = vld [vmem:[#allocation5 + $0x3c0] sm:$0xff]
    %v316 = vld [vmem:[#allocation5 + $0x3c8] sm:$0xff]
    %v317 = vld [vmem:[#allocation5 + $0x3d0] sm:$0xff]
    %v318 = vld [vmem:[#allocation5 + $0x3d8] sm:$0xff]
    %v319 = vld [vmem:[#allocation5 + $0x3e0] sm:$0xff]
    %v320 = vld [vmem:[#allocation5 + $0x3e8] sm:$0xff]
    %v321 = vld [vmem:[#allocation5 + $0x3f0] sm:$0xff]
    %v322 = vld [vmem:[#allocation5 + $0x3f8] sm:$0xff]
    %v323 = vand.u32 2147483647, %v195
    %v324 = vand.u32 2147483647, %v196
    %v325 = vand.u32 2147483647, %v197
    %v326 = vand.u32 2147483647, %v198
    %v327 = vand.u32 2147483647, %v199
    %v328 = vand.u32 2147483647, %v200
    %v329 = vand.u32 2147483647, %v201
    %v330 = vand.u32 2147483647, %v202
    %v331 = vand.u32 2147483647, %v203
    %v332 = vand.u32 2147483647, %v204
    %v333 = vand.u32 2147483647, %v205
    %v334 = vand.u32 2147483647, %v206
    %v335 = vand.u32 2147483647, %v207
    %v336 = vand.u32 2147483647, %v208
    %v337 = vand.u32 2147483647, %v209
    %v338 = vand.u32 2147483647, %v210
    %v339 = vand.u32 2147483647, %v211
    %v340 = vand.u32 2147483647, %v212
    %v341 = vand.u32 2147483647, %v213
    %v342 = vand.u32 2147483647, %v214
    %v343 = vand.u32 2147483647, %v215
    %v344 = vand.u32 2147483647, %v216
    %v345 = vand.u32 2147483647, %v217
    %v346 = vand.u32 2147483647, %v218
    %v347 = vand.u32 2147483647, %v219
    %v348 = vand.u32 2147483647, %v220
    %v349 = vand.u32 2147483647, %v221
    %v350 = vand.u32 2147483647, %v222
    %v351 = vand.u32 2147483647, %v223
    %v352 = vand.u32 2147483647, %v224
    %v353 = vand.u32 2147483647, %v225
    %v354 = vand.u32 2147483647, %v226
    %v355 = vand.u32 2147483647, %v227
    %v356 = vand.u32 2147483647, %v228
    %v357 = vand.u32 2147483647, %v229
    %v358 = vand.u32 2147483647, %v230
    %v359 = vand.u32 2147483647, %v231
    %v360 = vand.u32 2147483647, %v232
    %v361 = vand.u32 2147483647, %v233
    %v362 = vand.u32 2147483647, %v234
    %v363 = vand.u32 2147483647, %v235
    %v364 = vand.u32 2147483647, %v236
    %v365 = vand.u32 2147483647, %v237
    %v366 = vand.u32 2147483647, %v238
    %v367 = vand.u32 2147483647, %v239
    %v368 = vand.u32 2147483647, %v240
    %v369 = vand.u32 2147483647, %v241
    %v370 = vand.u32 2147483647, %v242
    %v371 = vand.u32 2147483647, %v243
    %v372 = vand.u32 2147483647, %v244
    %v373 = vand.u32 2147483647, %v245
    %v374 = vand.u32 2147483647, %v246
    %v375 = vand.u32 2147483647, %v247
    %v376 = vand.u32 2147483647, %v248
    %v377 = vand.u32 2147483647, %v249
    %v378 = vand.u32 2147483647, %v250
    %v379 = vand.u32 2147483647, %v251
    %v380 = vand.u32 2147483647, %v252
    %v381 = vand.u32 2147483647, %v253
    %v382 = vand.u32 2147483647, %v254
    %v383 = vand.u32 2147483647, %v255
    %v384 = vand.u32 2147483647, %v256
    %v385 = vand.u32 2147483647, %v257
    %v386 = vand.u32 2147483647, %v258
    %v387 = vand.u32 2147483647, %v259
    %v388 = vand.u32 2147483647, %v260
    %v389 = vand.u32 2147483647, %v261
    %v390 = vand.u32 2147483647, %v262
    %v391 = vand.u32 2147483647, %v263
    %v392 = vand.u32 2147483647, %v264
    %v393 = vand.u32 2147483647, %v265
    %v394 = vand.u32 2147483647, %v266
    %v395 = vand.u32 2147483647, %v267
    %v396 = vand.u32 2147483647, %v268
    %v397 = vand.u32 2147483647, %v269
    %v398 = vand.u32 2147483647, %v270
    %v399 = vand.u32 2147483647, %v271
    %v400 = vand.u32 2147483647, %v272
    %v401 = vand.u32 2147483647, %v273
    %v402 = vand.u32 2147483647, %v274
    %v403 = vand.u32 2147483647, %v275
    %v404 = vand.u32 2147483647, %v276
    %v405 = vand.u32 2147483647, %v277
    %v406 = vand.u32 2147483647, %v278
    %v407 = vand.u32 2147483647, %v279
    %v408 = vand.u32 2147483647, %v280
    %v409 = vand.u32 2147483647, %v281
    %v410 = vand.u32 2147483647, %v282
    %v411 = vand.u32 2147483647, %v283
    %v412 = vand.u32 2147483647, %v284
    %v413 = vand.u32 2147483647, %v285
    %v414 = vand.u32 2147483647, %v286
    %v415 = vand.u32 2147483647, %v287
    %v416 = vand.u32 2147483647, %v288
    %v417 = vand.u32 2147483647, %v289
    %v418 = vand.u32 2147483647, %v290
    %v419 = vand.u32 2147483647, %v291
    %v420 = vand.u32 2147483647, %v292
    %v421 = vand.u32 2147483647, %v293
    %v422 = vand.u32 2147483647, %v294
    %v423 = vand.u32 2147483647, %v295
    %v424 = vand.u32 2147483647, %v296
    %v425 = vand.u32 2147483647, %v297
    %v426 = vand.u32 2147483647, %v298
    %v427 = vand.u32 2147483647, %v299
    %v428 = vand.u32 2147483647, %v300
    %v429 = vand.u32 2147483647, %v301
    %v430 = vand.u32 2147483647, %v302
    %v431 = vand.u32 2147483647, %v303
    %v432 = vand.u32 2147483647, %v304
    %v433 = vand.u32 2147483647, %v305
    %v434 = vand.u32 2147483647, %v306
    %v435 = vand.u32 2147483647, %v307
    %v436 = vand.u32 2147483647, %v308
    %v437 = vand.u32 2147483647, %v309
    %v438 = vand.u32 2147483647, %v310
    %v439 = vand.u32 2147483647, %v311
    %v440 = vand.u32 2147483647, %v312
    %v441 = vand.u32 2147483647, %v313
    %v442 = vand.u32 2147483647, %v314
    %v443 = vand.u32 2147483647, %v315
    %v444 = vand.u32 2147483647, %v316
    %v445 = vand.u32 2147483647, %v317
    %v446 = vand.u32 2147483647, %v318
    %v447 = vand.u32 2147483647, %v319
    %v448 = vand.u32 2147483647, %v320
    %v449 = vand.u32 2147483647, %v321
    %v450 = vand.u32 2147483647, %v322
    %v451 = vand.u32 2147483647, %v67
    %v452 = vand.u32 2147483647, %v68
    %v453 = vand.u32 2147483647, %v69
    %v454 = vand.u32 2147483647, %v70
    %v455 = vand.u32 2147483647, %v71
    %v456 = vand.u32 2147483647, %v72
    %v457 = vand.u32 2147483647, %v73
    %v458 = vand.u32 2147483647, %v74
    %v459 = vand.u32 2147483647, %v75
    %v460 = vand.u32 2147483647, %v76
    %v461 = vand.u32 2147483647, %v77
    %v462 = vand.u32 2147483647, %v78
    %v463 = vand.u32 2147483647, %v79
    %v464 = vand.u32 2147483647, %v80
    %v465 = vand.u32 2147483647, %v81
    %v466 = vand.u32 2147483647, %v82
    %v467 = vand.u32 2147483647, %v83
    %v468 = vand.u32 2147483647, %v84
    %v469 = vand.u32 2147483647, %v85
    %v470 = vand.u32 2147483647, %v86
    %v471 = vand.u32 2147483647, %v87
    %v472 = vand.u32 2147483647, %v88
    %v473 = vand.u32 2147483647, %v89
    %v474 = vand.u32 2147483647, %v90
    %v475 = vand.u32 2147483647, %v91
    %v476 = vand.u32 2147483647, %v92
    %v477 = vand.u32 2147483647, %v93
    %v478 = vand.u32 2147483647, %v94
    %v479 = vand.u32 2147483647, %v95
    %v480 = vand.u32 2147483647, %v96
    %v481 = vand.u32 2147483647, %v97
    %v482 = vand.u32 2147483647, %v98
    %v483 = vand.u32 2147483647, %v99
    %v484 = vand.u32 2147483647, %v100
    %v485 = vand.u32 2147483647, %v101
    %v486 = vand.u32 2147483647, %v102
    %v487 = vand.u32 2147483647, %v103
    %v488 = vand.u32 2147483647, %v104
    %v489 = vand.u32 2147483647, %v105
    %v490 = vand.u32 2147483647, %v106
    %v491 = vand.u32 2147483647, %v107
    %v492 = vand.u32 2147483647, %v108
    %v493 = vand.u32 2147483647, %v109
    %v494 = vand.u32 2147483647, %v110
    %v495 = vand.u32 2147483647, %v111
    %v496 = vand.u32 2147483647, %v112
    %v497 = vand.u32 2147483647, %v113
    %v498 = vand.u32 2147483647, %v114
    %v499 = vand.u32 2147483647, %v115
    %v500 = vand.u32 2147483647, %v116
    %v501 = vand.u32 2147483647, %v117
    %v502 = vand.u32 2147483647, %v118
    %v503 = vand.u32 2147483647, %v119
    %v504 = vand.u32 2147483647, %v120
    %v505 = vand.u32 2147483647, %v121
    %v506 = vand.u32 2147483647, %v122
    %v507 = vand.u32 2147483647, %v123
    %v508 = vand.u32 2147483647, %v124
    %v509 = vand.u32 2147483647, %v125
    %v510 = vand.u32 2147483647, %v126
    %v511 = vand.u32 2147483647, %v127
    %v512 = vand.u32 2147483647, %v128
    %v513 = vand.u32 2147483647, %v129
    %v514 = vand.u32 2147483647, %v130
    %v515 = vand.u32 2147483647, %v131
    %v516 = vand.u32 2147483647, %v132
    %v517 = vand.u32 2147483647, %v133
    %v518 = vand.u32 2147483647, %v134
    %v519 = vand.u32 2147483647, %v135
    %v520 = vand.u32 2147483647, %v136
    %v521 = vand.u32 2147483647, %v137
    %v522 = vand.u32 2147483647, %v138
    %v523 = vand.u32 2147483647, %v139
    %v524 = vand.u32 2147483647, %v140
    %v525 = vand.u32 2147483647, %v141
    %v526 = vand.u32 2147483647, %v142
    %v527 = vand.u32 2147483647, %v143
    %v528 = vand.u32 2147483647, %v144
    %v529 = vand.u32 2147483647, %v145
    %v530 = vand.u32 2147483647, %v146
    %v531 = vand.u32 2147483647, %v147
    %v532 = vand.u32 2147483647, %v148
    %v533 = vand.u32 2147483647, %v149
    %v534 = vand.u32 2147483647, %v150
    %v535 = vand.u32 2147483647, %v151
    %v536 = vand.u32 2147483647, %v152
    %v537 = vand.u32 2147483647, %v153
    %v538 = vand.u32 2147483647, %v154
    %v539 = vand.u32 2147483647, %v155
    %v540 = vand.u32 2147483647, %v156
    %v541 = vand.u32 2147483647, %v157
    %v542 = vand.u32 2147483647, %v158
    %v543 = vand.u32 2147483647, %v159
    %v544 = vand.u32 2147483647, %v160
    %v545 = vand.u32 2147483647, %v161
    %v546 = vand.u32 2147483647, %v162
    %v547 = vand.u32 2147483647, %v163
    %v548 = vand.u32 2147483647, %v164
    %v549 = vand.u32 2147483647, %v165
    %v550 = vand.u32 2147483647, %v166
    %v551 = vand.u32 2147483647, %v167
    %v552 = vand.u32 2147483647, %v168
    %v553 = vand.u32 2147483647, %v169
    %v554 = vand.u32 2147483647, %v170
    %v555 = vand.u32 2147483647, %v171
    %v556 = vand.u32 2147483647, %v172
    %v557 = vand.u32 2147483647, %v173
    %v558 = vand.u32 2147483647, %v174
    %v559 = vand.u32 2147483647, %v175
    %v560 = vand.u32 2147483647, %v176
    %v561 = vand.u32 2147483647, %v177
    %v562 = vand.u32 2147483647, %v178
    %v563 = vand.u32 2147483647, %v179
    %v564 = vand.u32 2147483647, %v180
    %v565 = vand.u32 2147483647, %v181
    %v566 = vand.u32 2147483647, %v182
    %v567 = vand.u32 2147483647, %v183
    %v568 = vand.u32 2147483647, %v184
    %v569 = vand.u32 2147483647, %v185
    %v570 = vand.u32 2147483647, %v186
    %v571 = vand.u32 2147483647, %v187
    %v572 = vand.u32 2147483647, %v188
    %v573 = vand.u32 2147483647, %v189
    %v574 = vand.u32 2147483647, %v190
    %v575 = vand.u32 2147483647, %v191
    %v576 = vand.u32 2147483647, %v192
    %v577 = vand.u32 2147483647, %v193
    %v578 = vand.u32 2147483647, %v194
    %v579 = vsub.f32 %v323, %v451
    %v580 = vsub.f32 %v324, %v452
    %v581 = vsub.f32 %v325, %v453
    %v582 = vsub.f32 %v326, %v454
    %v583 = vsub.f32 %v327, %v455
    %v584 = vsub.f32 %v328, %v456
    %v585 = vsub.f32 %v329, %v457
    %v586 = vsub.f32 %v330, %v458
    %v587 = vsub.f32 %v331, %v459
    %v588 = vsub.f32 %v332, %v460
    %v589 = vsub.f32 %v333, %v461
    %v590 = vsub.f32 %v334, %v462
    %v591 = vsub.f32 %v335, %v463
    %v592 = vsub.f32 %v336, %v464
    %v593 = vsub.f32 %v337, %v465
    %v594 = vsub.f32 %v338, %v466
    %v595 = vsub.f32 %v339, %v467
    %v596 = vsub.f32 %v340, %v468
    %v597 = vsub.f32 %v341, %v469
    %v598 = vsub.f32 %v342, %v470
    %v599 = vsub.f32 %v343, %v471
    %v600 = vsub.f32 %v344, %v472
    %v601 = vsub.f32 %v345, %v473
    %v602 = vsub.f32 %v346, %v474
    %v603 = vsub.f32 %v347, %v475
    %v604 = vsub.f32 %v348, %v476
    %v605 = vsub.f32 %v349, %v477
    %v606 = vsub.f32 %v350, %v478
    %v607 = vsub.f32 %v351, %v479
    %v608 = vsub.f32 %v352, %v480
    %v609 = vsub.f32 %v353, %v481
    %v610 = vsub.f32 %v354, %v482
    %v611 = vsub.f32 %v355, %v483
    %v612 = vsub.f32 %v356, %v484
    %v613 = vsub.f32 %v357, %v485
    %v614 = vsub.f32 %v358, %v486
    %v615 = vsub.f32 %v359, %v487
    %v616 = vsub.f32 %v360, %v488
    %v617 = vsub.f32 %v361, %v489
    %v618 = vsub.f32 %v362, %v490
    %v619 = vsub.f32 %v363, %v491
    %v620 = vsub.f32 %v364, %v492
    %v621 = vsub.f32 %v365, %v493
    %v622 = vsub.f32 %v366, %v494
    %v623 = vsub.f32 %v367, %v495
    %v624 = vsub.f32 %v368, %v496
    %v625 = vsub.f32 %v369, %v497
    %v626 = vsub.f32 %v370, %v498
    %v627 = vsub.f32 %v371, %v499
    %v628 = vsub.f32 %v372, %v500
    %v629 = vsub.f32 %v373, %v501
    %v630 = vsub.f32 %v374, %v502
    %v631 = vsub.f32 %v375, %v503
    %v632 = vsub.f32 %v376, %v504
    %v633 = vsub.f32 %v377, %v505
    %v634 = vsub.f32 %v378, %v506
    %v635 = vsub.f32 %v379, %v507
    %v636 = vsub.f32 %v380, %v508
    %v637 = vsub.f32 %v381, %v509
    %v638 = vsub.f32 %v382, %v510
    %v639 = vsub.f32 %v383, %v511
    %v640 = vsub.f32 %v384, %v512
    %v641 = vsub.f32 %v385, %v513
    %v642 = vsub.f32 %v386, %v514
    %v643 = vsub.f32 %v387, %v515
    %v644 = vsub.f32 %v388, %v516
    %v645 = vsub.f32 %v389, %v517
    %v646 = vsub.f32 %v390, %v518
    %v647 = vsub.f32 %v391, %v519
    %v648 = vsub.f32 %v392, %v520
    %v649 = vsub.f32 %v393, %v521
    %v650 = vsub.f32 %v394, %v522
    %v651 = vsub.f32 %v395, %v523
    %v652 = vsub.f32 %v396, %v524
    %v653 = vsub.f32 %v397, %v525
    %v654 = vsub.f32 %v398, %v526
    %v655 = vsub.f32 %v399, %v527
    %v656 = vsub.f32 %v400, %v528
    %v657 = vsub.f32 %v401, %v529
    %v658 = vsub.f32 %v402, %v530
    %v659 = vsub.f32 %v403, %v531
    %v660 = vsub.f32 %v404, %v532
    %v661 = vsub.f32 %v405, %v533
    %v662 = vsub.f32 %v406, %v534
    %v663 = vsub.f32 %v407, %v535
    %v664 = vsub.f32 %v408, %v536
    %v665 = vsub.f32 %v409, %v537
    %v666 = vsub.f32 %v410, %v538
    %v667 = vsub.f32 %v411, %v539
    %v668 = vsub.f32 %v412, %v540
    %v669 = vsub.f32 %v413, %v541
    %v670 = vsub.f32 %v414, %v542
    %v671 = vsub.f32 %v415, %v543
    %v672 = vsub.f32 %v416, %v544
    %v673 = vsub.f32 %v417, %v545
    %v674 = vsub.f32 %v418, %v546
    %v675 = vsub.f32 %v419, %v547
    %v676 = vsub.f32 %v420, %v548
    %v677 = vsub.f32 %v421, %v549
    %v678 = vsub.f32 %v422, %v550
    %v679 = vsub.f32 %v423, %v551
    %v680 = vsub.f32 %v424, %v552
    %v681 = vsub.f32 %v425, %v553
    %v682 = vsub.f32 %v426, %v554
    %v683 = vsub.f32 %v427, %v555
    %v684 = vsub.f32 %v428, %v556
    %v685 = vsub.f32 %v429, %v557
    %v686 = vsub.f32 %v430, %v558
    %v687 = vsub.f32 %v431, %v559
    %v688 = vsub.f32 %v432, %v560
    %v689 = vsub.f32 %v433, %v561
    %v690 = vsub.f32 %v434, %v562
    %v691 = vsub.f32 %v435, %v563
    %v692 = vsub.f32 %v436, %v564
    %v693 = vsub.f32 %v437, %v565
    %v694 = vsub.f32 %v438, %v566
    %v695 = vsub.f32 %v439, %v567
    %v696 = vsub.f32 %v440, %v568
    %v697 = vsub.f32 %v441, %v569
    %v698 = vsub.f32 %v442, %v570
    %v699 = vsub.f32 %v443, %v571
    %v700 = vsub.f32 %v444, %v572
    %v701 = vsub.f32 %v445, %v573
    %v702 = vsub.f32 %v446, %v574
    %v703 = vsub.f32 %v447, %v575
    %v704 = vsub.f32 %v448, %v576
    %v705 = vsub.f32 %v449, %v577
    %v706 = vsub.f32 %v450, %v578
    %v707 = vmul.f32 %v579, 2.0
    %v708 = vmul.f32 %v580, 2.0
    %v709 = vmul.f32 %v581, 2.0
    %v710 = vmul.f32 %v582, 2.0
    %v711 = vmul.f32 %v583, 2.0
    %v712 = vmul.f32 %v584, 2.0
    %v713 = vmul.f32 %v585, 2.0
    %v714 = vmul.f32 %v586, 2.0
    %v715 = vmul.f32 %v587, 2.0
    %v716 = vmul.f32 %v588, 2.0
    %v717 = vmul.f32 %v589, 2.0
    %v718 = vmul.f32 %v590, 2.0
    %v719 = vmul.f32 %v591, 2.0
    %v720 = vmul.f32 %v592, 2.0
    %v721 = vmul.f32 %v593, 2.0
    %v722 = vmul.f32 %v594, 2.0
    %v723 = vmul.f32 %v595, 2.0
    %v724 = vmul.f32 %v596, 2.0
    %v725 = vmul.f32 %v597, 2.0
    %v726 = vmul.f32 %v598, 2.0
    %v727 = vmul.f32 %v599, 2.0
    %v728 = vmul.f32 %v600, 2.0
    %v729 = vmul.f32 %v601, 2.0
    %v730 = vmul.f32 %v602, 2.0
    %v731 = vmul.f32 %v603, 2.0
    %v732 = vmul.f32 %v604, 2.0
    %v733 = vmul.f32 %v605, 2.0
    %v734 = vmul.f32 %v606, 2.0
    %v735 = vmul.f32 %v607, 2.0
    %v736 = vmul.f32 %v608, 2.0
    %v737 = vmul.f32 %v609, 2.0
    %v738 = vmul.f32 %v610, 2.0
    %v739 = vmul.f32 %v611, 2.0
    %v740 = vmul.f32 %v612, 2.0
    %v741 = vmul.f32 %v613, 2.0
    %v742 = vmul.f32 %v614, 2.0
    %v743 = vmul.f32 %v615, 2.0
    %v744 = vmul.f32 %v616, 2.0
    %v745 = vmul.f32 %v617, 2.0
    %v746 = vmul.f32 %v618, 2.0
    %v747 = vmul.f32 %v619, 2.0
    %v748 = vmul.f32 %v620, 2.0
    %v749 = vmul.f32 %v621, 2.0
    %v750 = vmul.f32 %v622, 2.0
    %v751 = vmul.f32 %v623, 2.0
    %v752 = vmul.f32 %v624, 2.0
    %v753 = vmul.f32 %v625, 2.0
    %v754 = vmul.f32 %v626, 2.0
    %v755 = vmul.f32 %v627, 2.0
    %v756 = vmul.f32 %v628, 2.0
    %v757 = vmul.f32 %v629, 2.0
    %v758 = vmul.f32 %v630, 2.0
    %v759 = vmul.f32 %v631, 2.0
    %v760 = vmul.f32 %v632, 2.0
    %v761 = vmul.f32 %v633, 2.0
    %v762 = vmul.f32 %v634, 2.0
    %v763 = vmul.f32 %v635, 2.0
    %v764 = vmul.f32 %v636, 2.0
    %v765 = vmul.f32 %v637, 2.0
    %v766 = vmul.f32 %v638, 2.0
    %v767 = vmul.f32 %v639, 2.0
    %v768 = vmul.f32 %v640, 2.0
    %v769 = vmul.f32 %v641, 2.0
    %v770 = vmul.f32 %v642, 2.0
    %v771 = vmul.f32 %v643, 2.0
    %v772 = vmul.f32 %v644, 2.0
    %v773 = vmul.f32 %v645, 2.0
    %v774 = vmul.f32 %v646, 2.0
    %v775 = vmul.f32 %v647, 2.0
    %v776 = vmul.f32 %v648, 2.0
    %v777 = vmul.f32 %v649, 2.0
    %v778 = vmul.f32 %v650, 2.0
    %v779 = vmul.f32 %v651, 2.0
    %v780 = vmul.f32 %v652, 2.0
    %v781 = vmul.f32 %v653, 2.0
    %v782 = vmul.f32 %v654, 2.0
    %v783 = vmul.f32 %v655, 2.0
    %v784 = vmul.f32 %v656, 2.0
    %v785 = vmul.f32 %v657, 2.0
    %v786 = vmul.f32 %v658, 2.0
    %v787 = vmul.f32 %v659, 2.0
    %v788 = vmul.f32 %v660, 2.0
    %v789 = vmul.f32 %v661, 2.0
    %v790 = vmul.f32 %v662, 2.0
    %v791 = vmul.f32 %v663, 2.0
    %v792 = vmul.f32 %v664, 2.0
    %v793 = vmul.f32 %v665, 2.0
    %v794 = vmul.f32 %v666, 2.0
    %v795 = vmul.f32 %v667, 2.0
    %v796 = vmul.f32 %v668, 2.0
    %v797 = vmul.f32 %v669, 2.0
    %v798 = vmul.f32 %v670, 2.0
    %v799 = vmul.f32 %v671, 2.0
    %v800 = vmul.f32 %v672, 2.0
    %v801 = vmul.f32 %v673, 2.0
    %v802 = vmul.f32 %v674, 2.0
    %v803 = vmul.f32 %v675, 2.0
    %v804 = vmul.f32 %v676, 2.0
    %v805 = vmul.f32 %v677, 2.0
    %v806 = vmul.f32 %v678, 2.0
    %v807 = vmul.f32 %v679, 2.0
    %v808 = vmul.f32 %v680, 2.0
    %v809 = vmul.f32 %v681, 2.0
    %v810 = vmul.f32 %v682, 2.0
    %v811 = vmul.f32 %v683, 2.0
    %v812 = vmul.f32 %v684, 2.0
    %v813 = vmul.f32 %v685, 2.0
    %v814 = vmul.f32 %v686, 2.0
    %v815 = vmul.f32 %v687, 2.0
    %v816 = vmul.f32 %v688, 2.0
    %v817 = vmul.f32 %v689, 2.0
    %v818 = vmul.f32 %v690, 2.0
    %v819 = vmul.f32 %v691, 2.0
    %v820 = vmul.f32 %v692, 2.0
    %v821 = vmul.f32 %v693, 2.0
    %v822 = vmul.f32 %v694, 2.0
    %v823 = vmul.f32 %v695, 2.0
    %v824 = vmul.f32 %v696, 2.0
    %v825 = vmul.f32 %v697, 2.0
    %v826 = vmul.f32 %v698, 2.0
    %v827 = vmul.f32 %v699, 2.0
    %v828 = vmul.f32 %v700, 2.0
    %v829 = vmul.f32 %v701, 2.0
    %v830 = vmul.f32 %v702, 2.0
    %v831 = vmul.f32 %v703, 2.0
    %v832 = vmul.f32 %v704, 2.0
    %v833 = vmul.f32 %v705, 2.0
    %v834 = vmul.f32 %v706, 2.0
    %v835 = vmul.f32 %v707, 1.442695
    %v836 = vpow.pop %v835
    %v837 = vmul.f32 %v708, 1.442695
    %v838 = vpow.pop %v837
    %v839 = vmul.f32 %v709, 1.442695
    %v840 = vpow.pop %v839
    %v841 = vmul.f32 %v710, 1.442695
    %v842 = vpow.pop %v841
    %v843 = vmul.f32 %v711, 1.442695
    %v844 = vpow.pop %v843
    %v845 = vmul.f32 %v712, 1.442695
    %v846 = vpow.pop %v845
    %v847 = vmul.f32 %v713, 1.442695
    %v848 = vpow.pop %v847
    %v849 = vmul.f32 %v714, 1.442695
    %v850 = vpow.pop %v849
    %v851 = vmul.f32 %v715, 1.442695
    %v852 = vpow.pop %v851
    %v853 = vmul.f32 %v716, 1.442695
    %v854 = vpow.pop %v853
    %v855 = vmul.f32 %v717, 1.442695
    %v856 = vpow.pop %v855
    %v857 = vmul.f32 %v718, 1.442695
    %v858 = vpow.pop %v857
    %v859 = vmul.f32 %v719, 1.442695
    %v860 = vpow.pop %v859
    %v861 = vmul.f32 %v720, 1.442695
    %v862 = vpow.pop %v861
    %v863 = vmul.f32 %v721, 1.442695
    %v864 = vpow.pop %v863
    %v865 = vmul.f32 %v722, 1.442695
    %v866 = vpow.pop %v865
    %v867 = vmul.f32 %v723, 1.442695
    %v868 = vpow.pop %v867
    %v869 = vmul.f32 %v724, 1.442695
    %v870 = vpow.pop %v869
    %v871 = vmul.f32 %v725, 1.442695
    %v872 = vpow.pop %v871
    %v873 = vmul.f32 %v726, 1.442695
    %v874 = vpow.pop %v873
    %v875 = vmul.f32 %v727, 1.442695
    %v876 = vpow.pop %v875
    %v877 = vmul.f32 %v728, 1.442695
    %v878 = vpow.pop %v877
    %v879 = vmul.f32 %v729, 1.442695
    %v880 = vpow.pop %v879
    %v881 = vmul.f32 %v730, 1.442695
    %v882 = vpow.pop %v881
    %v883 = vmul.f32 %v731, 1.442695
    %v884 = vpow.pop %v883
    %v885 = vmul.f32 %v732, 1.442695
    %v886 = vpow.pop %v885
    %v887 = vmul.f32 %v733, 1.442695
    %v888 = vpow.pop %v887
    %v889 = vmul.f32 %v734, 1.442695
    %v890 = vpow.pop %v889
    %v891 = vmul.f32 %v735, 1.442695
    %v892 = vpow.pop %v891
    %v893 = vmul.f32 %v736, 1.442695
    %v894 = vpow.pop %v893
    %v895 = vmul.f32 %v737, 1.442695
    %v896 = vpow.pop %v895
    %v897 = vmul.f32 %v738, 1.442695
    %v898 = vpow.pop %v897
    %v899 = vmul.f32 %v739, 1.442695
    %v900 = vpow.pop %v899
    %v901 = vmul.f32 %v740, 1.442695
    %v902 = vpow.pop %v901
    %v903 = vmul.f32 %v741, 1.442695
    %v904 = vpow.pop %v903
    %v905 = vmul.f32 %v742, 1.442695
    %v906 = vpow.pop %v905
    %v907 = vmul.f32 %v743, 1.442695
    %v908 = vpow.pop %v907
    %v909 = vmul.f32 %v744, 1.442695
    %v910 = vpow.pop %v909
    %v911 = vmul.f32 %v745, 1.442695
    %v912 = vpow.pop %v911
    %v913 = vmul.f32 %v746, 1.442695
    %v914 = vpow.pop %v913
    %v915 = vmul.f32 %v747, 1.442695
    %v916 = vpow.pop %v915
    %v917 = vmul.f32 %v748, 1.442695
    %v918 = vpow.pop %v917
    %v919 = vmul.f32 %v749, 1.442695
    %v920 = vpow.pop %v919
    %v921 = vmul.f32 %v750, 1.442695
    %v922 = vpow.pop %v921
    %v923 = vmul.f32 %v751, 1.442695
    %v924 = vpow.pop %v923
    %v925 = vmul.f32 %v752, 1.442695
    %v926 = vpow.pop %v925
    %v927 = vmul.f32 %v753, 1.442695
    %v928 = vpow.pop %v927
    %v929 = vmul.f32 %v754, 1.442695
    %v930 = vpow.pop %v929
    %v931 = vmul.f32 %v755, 1.442695
    %v932 = vpow.pop %v931
    %v933 = vmul.f32 %v756, 1.442695
    %v934 = vpow.pop %v933
    %v935 = vmul.f32 %v757, 1.442695
    %v936 = vpow.pop %v935
    %v937 = vmul.f32 %v758, 1.442695
    %v938 = vpow.pop %v937
    %v939 = vmul.f32 %v759, 1.442695
    %v940 = vpow.pop %v939
    %v941 = vmul.f32 %v760, 1.442695
    %v942 = vpow.pop %v941
    %v943 = vmul.f32 %v761, 1.442695
    %v944 = vpow.pop %v943
    %v945 = vmul.f32 %v762, 1.442695
    %v946 = vpow.pop %v945
    %v947 = vmul.f32 %v763, 1.442695
    %v948 = vpow.pop %v947
    %v949 = vmul.f32 %v764, 1.442695
    %v950 = vpow.pop %v949
    %v951 = vmul.f32 %v765, 1.442695
    %v952 = vpow.pop %v951
    %v953 = vmul.f32 %v766, 1.442695
    %v954 = vpow.pop %v953
    %v955 = vmul.f32 %v767, 1.442695
    %v956 = vpow.pop %v955
    %v957 = vmul.f32 %v768, 1.442695
    %v958 = vpow.pop %v957
    %v959 = vmul.f32 %v769, 1.442695
    %v960 = vpow.pop %v959
    %v961 = vmul.f32 %v770, 1.442695
    %v962 = vpow.pop %v961
    %v963 = vmul.f32 %v771, 1.442695
    %v964 = vpow.pop %v963
    %v965 = vmul.f32 %v772, 1.442695
    %v966 = vpow.pop %v965
    %v967 = vmul.f32 %v773, 1.442695
    %v968 = vpow.pop %v967
    %v969 = vmul.f32 %v774, 1.442695
    %v970 = vpow.pop %v969
    %v971 = vmul.f32 %v775, 1.442695
    %v972 = vpow.pop %v971
    %v973 = vmul.f32 %v776, 1.442695
    %v974 = vpow.pop %v973
    %v975 = vmul.f32 %v777, 1.442695
    %v976 = vpow.pop %v975
    %v977 = vmul.f32 %v778, 1.442695
    %v978 = vpow.pop %v977
    %v979 = vmul.f32 %v779, 1.442695
    %v980 = vpow.pop %v979
    %v981 = vmul.f32 %v780, 1.442695
    %v982 = vpow.pop %v981
    %v983 = vmul.f32 %v781, 1.442695
    %v984 = vpow.pop %v983
    %v985 = vmul.f32 %v782, 1.442695
    %v986 = vpow.pop %v985
    %v987 = vmul.f32 %v783, 1.442695
    %v988 = vpow.pop %v987
    %v989 = vmul.f32 %v784, 1.442695
    %v990 = vpow.pop %v989
    %v991 = vmul.f32 %v785, 1.442695
    %v992 = vpow.pop %v991
    %v993 = vmul.f32 %v786, 1.442695
    %v994 = vpow.pop %v993
    %v995 = vmul.f32 %v787, 1.442695
    %v996 = vpow.pop %v995
    %v997 = vmul.f32 %v788, 1.442695
    %v998 = vpow.pop %v997
    %v999 = vmul.f32 %v789, 1.442695
    %v1000 = vpow.pop %v999
    %v1001 = vmul.f32 %v790, 1.442695
    %v1002 = vpow.pop %v1001
    %v1003 = vmul.f32 %v791, 1.442695
    %v1004 = vpow.pop %v1003
    %v1005 = vmul.f32 %v792, 1.442695
    %v1006 = vpow.pop %v1005
    %v1007 = vmul.f32 %v793, 1.442695
    %v1008 = vpow.pop %v1007
    %v1009 = vmul.f32 %v794, 1.442695
    %v1010 = vpow.pop %v1009
    %v1011 = vmul.f32 %v795, 1.442695
    %v1012 = vpow.pop %v1011
    %v1013 = vmul.f32 %v796, 1.442695
    %v1014 = vpow.pop %v1013
    %v1015 = vmul.f32 %v797, 1.442695
    %v1016 = vpow.pop %v1015
    %v1017 = vmul.f32 %v798, 1.442695
    %v1018 = vpow.pop %v1017
    %v1019 = vmul.f32 %v799, 1.442695
    %v1020 = vpow.pop %v1019
    %v1021 = vmul.f32 %v800, 1.442695
    %v1022 = vpow.pop %v1021
    %v1023 = vmul.f32 %v801, 1.442695
    %v1024 = vpow.pop %v1023
    %v1025 = vmul.f32 %v802, 1.442695
    %v1026 = vpow.pop %v1025
    %v1027 = vmul.f32 %v803, 1.442695
    %v1028 = vpow.pop %v1027
    %v1029 = vmul.f32 %v804, 1.442695
    %v1030 = vpow.pop %v1029
    %v1031 = vmul.f32 %v805, 1.442695
    %v1032 = vpow.pop %v1031
    %v1033 = vmul.f32 %v806, 1.442695
    %v1034 = vpow.pop %v1033
    %v1035 = vmul.f32 %v807, 1.442695
    %v1036 = vpow.pop %v1035
    %v1037 = vmul.f32 %v808, 1.442695
    %v1038 = vpow.pop %v1037
    %v1039 = vmul.f32 %v809, 1.442695
    %v1040 = vpow.pop %v1039
    %v1041 = vmul.f32 %v810, 1.442695
    %v1042 = vpow.pop %v1041
    %v1043 = vmul.f32 %v811, 1.442695
    %v1044 = vpow.pop %v1043
    %v1045 = vmul.f32 %v812, 1.442695
    %v1046 = vpow.pop %v1045
    %v1047 = vmul.f32 %v813, 1.442695
    %v1048 = vpow.pop %v1047
    %v1049 = vmul.f32 %v814, 1.442695
    %v1050 = vpow.pop %v1049
    %v1051 = vmul.f32 %v815, 1.442695
    %v1052 = vpow.pop %v1051
    %v1053 = vmul.f32 %v816, 1.442695
    %v1054 = vpow.pop %v1053
    %v1055 = vmul.f32 %v817, 1.442695
    %v1056 = vpow.pop %v1055
    %v1057 = vmul.f32 %v818, 1.442695
    %v1058 = vpow.pop %v1057
    %v1059 = vmul.f32 %v819, 1.442695
    %v1060 = vpow.pop %v1059
    %v1061 = vmul.f32 %v820, 1.442695
    %v1062 = vpow.pop %v1061
    %v1063 = vmul.f32 %v821, 1.442695
    %v1064 = vpow.pop %v1063
    %v1065 = vmul.f32 %v822, 1.442695
    %v1066 = vpow.pop %v1065
    %v1067 = vmul.f32 %v823, 1.442695
    %v1068 = vpow.pop %v1067
    %v1069 = vmul.f32 %v824, 1.442695
    %v1070 = vpow.pop %v1069
    %v1071 = vmul.f32 %v825, 1.442695
    %v1072 = vpow.pop %v1071
    %v1073 = vmul.f32 %v826, 1.442695
    %v1074 = vpow.pop %v1073
    %v1075 = vmul.f32 %v827, 1.442695
    %v1076 = vpow.pop %v1075
    %v1077 = vmul.f32 %v828, 1.442695
    %v1078 = vpow.pop %v1077
    %v1079 = vmul.f32 %v829, 1.442695
    %v1080 = vpow.pop %v1079
    %v1081 = vmul.f32 %v830, 1.442695
    %v1082 = vpow.pop %v1081
    %v1083 = vmul.f32 %v831, 1.442695
    %v1084 = vpow.pop %v1083
    %v1085 = vmul.f32 %v832, 1.442695
    %v1086 = vpow.pop %v1085
    %v1087 = vmul.f32 %v833, 1.442695
    %v1088 = vpow.pop %v1087
    %v1089 = vmul.f32 %v834, 1.442695
    %v1090 = vpow.pop %v1089
    %v1091 = vsub.f32 %v836, %v707
    %v1092 = vsub.f32 %v838, %v708
    %v1093 = vsub.f32 %v840, %v709
    %v1094 = vsub.f32 %v842, %v710
    %v1095 = vsub.f32 %v844, %v711
    %v1096 = vsub.f32 %v846, %v712
    %v1097 = vsub.f32 %v848, %v713
    %v1098 = vsub.f32 %v850, %v714
    %v1099 = vsub.f32 %v852, %v715
    %v1100 = vsub.f32 %v854, %v716
    %v1101 = vsub.f32 %v856, %v717
    %v1102 = vsub.f32 %v858, %v718
    %v1103 = vsub.f32 %v860, %v719
    %v1104 = vsub.f32 %v862, %v720
    %v1105 = vsub.f32 %v864, %v721
    %v1106 = vsub.f32 %v866, %v722
    %v1107 = vsub.f32 %v868, %v723
    %v1108 = vsub.f32 %v870, %v724
    %v1109 = vsub.f32 %v872, %v725
    %v1110 = vsub.f32 %v874, %v726
    %v1111 = vsub.f32 %v876, %v727
    %v1112 = vsub.f32 %v878, %v728
    %v1113 = vsub.f32 %v880, %v729
    %v1114 = vsub.f32 %v882, %v730
    %v1115 = vsub.f32 %v884, %v731
    %v1116 = vsub.f32 %v886, %v732
    %v1117 = vsub.f32 %v888, %v733
    %v1118 = vsub.f32 %v890, %v734
    %v1119 = vsub.f32 %v892, %v735
    %v1120 = vsub.f32 %v894, %v736
    %v1121 = vsub.f32 %v896, %v737
    %v1122 = vsub.f32 %v898, %v738
    %v1123 = vsub.f32 %v900, %v739
    %v1124 = vsub.f32 %v902, %v740
    %v1125 = vsub.f32 %v904, %v741
    %v1126 = vsub.f32 %v906, %v742
    %v1127 = vsub.f32 %v908, %v743
    %v1128 = vsub.f32 %v910, %v744
    %v1129 = vsub.f32 %v912, %v745
    %v1130 = vsub.f32 %v914, %v746
    %v1131 = vsub.f32 %v916, %v747
    %v1132 = vsub.f32 %v918, %v748
    %v1133 = vsub.f32 %v920, %v749
    %v1134 = vsub.f32 %v922, %v750
    %v1135 = vsub.f32 %v924, %v751
    %v1136 = vsub.f32 %v926, %v752
    %v1137 = vsub.f32 %v928, %v753
    %v1138 = vsub.f32 %v930, %v754
    %v1139 = vsub.f32 %v932, %v755
    %v1140 = vsub.f32 %v934, %v756
    %v1141 = vsub.f32 %v936, %v757
    %v1142 = vsub.f32 %v938, %v758
    %v1143 = vsub.f32 %v940, %v759
    %v1144 = vsub.f32 %v942, %v760
    %v1145 = vsub.f32 %v944, %v761
    %v1146 = vsub.f32 %v946, %v762
    %v1147 = vsub.f32 %v948, %v763
    %v1148 = vsub.f32 %v950, %v764
    %v1149 = vsub.f32 %v952, %v765
    %v1150 = vsub.f32 %v954, %v766
    %v1151 = vsub.f32 %v956, %v767
    %v1152 = vsub.f32 %v958, %v768
    %v1153 = vsub.f32 %v960, %v769
    %v1154 = vsub.f32 %v962, %v770
    %v1155 = vsub.f32 %v964, %v771
    %v1156 = vsub.f32 %v966, %v772
    %v1157 = vsub.f32 %v968, %v773
    %v1158 = vsub.f32 %v970, %v774
    %v1159 = vsub.f32 %v972, %v775
    %v1160 = vsub.f32 %v974, %v776
    %v1161 = vsub.f32 %v976, %v777
    %v1162 = vsub.f32 %v978, %v778
    %v1163 = vsub.f32 %v980, %v779
    %v1164 = vsub.f32 %v982, %v780
    %v1165 = vsub.f32 %v984, %v781
    %v1166 = vsub.f32 %v986, %v782
    %v1167 = vsub.f32 %v988, %v783
    %v1168 = vsub.f32 %v990, %v784
    %v1169 = vsub.f32 %v992, %v785
    %v1170 = vsub.f32 %v994, %v786
    %v1171 = vsub.f32 %v996, %v787
    %v1172 = vsub.f32 %v998, %v788
    %v1173 = vsub.f32 %v1000, %v789
    %v1174 = vsub.f32 %v1002, %v790
    %v1175 = vsub.f32 %v1004, %v791
    %v1176 = vsub.f32 %v1006, %v792
    %v1177 = vsub.f32 %v1008, %v793
    %v1178 = vsub.f32 %v1010, %v794
    %v1179 = vsub.f32 %v1012, %v795
    %v1180 = vsub.f32 %v1014, %v796
    %v1181 = vsub.f32 %v1016, %v797
    %v1182 = vsub.f32 %v1018, %v798
    %v1183 = vsub.f32 %v1020, %v799
    %v1184 = vsub.f32 %v1022, %v800
    %v1185 = vsub.f32 %v1024, %v801
    %v1186 = vsub.f32 %v1026, %v802
    %v1187 = vsub.f32 %v1028, %v803
    %v1188 = vsub.f32 %v1030, %v804
    %v1189 = vsub.f32 %v1032, %v805
    %v1190 = vsub.f32 %v1034, %v806
    %v1191 = vsub.f32 %v1036, %v807
    %v1192 = vsub.f32 %v1038, %v808
    %v1193 = vsub.f32 %v1040, %v809
    %v1194 = vsub.f32 %v1042, %v810
    %v1195 = vsub.f32 %v1044, %v811
    %v1196 = vsub.f32 %v1046, %v812
    %v1197 = vsub.f32 %v1048, %v813
    %v1198 = vsub.f32 %v1050, %v814
    %v1199 = vsub.f32 %v1052, %v815
    %v1200 = vsub.f32 %v1054, %v816
    %v1201 = vsub.f32 %v1056, %v817
    %v1202 = vsub.f32 %v1058, %v818
    %v1203 = vsub.f32 %v1060, %v819
    %v1204 = vsub.f32 %v1062, %v820
    %v1205 = vsub.f32 %v1064, %v821
    %v1206 = vsub.f32 %v1066, %v822
    %v1207 = vsub.f32 %v1068, %v823
    %v1208 = vsub.f32 %v1070, %v824
    %v1209 = vsub.f32 %v1072, %v825
    %v1210 = vsub.f32 %v1074, %v826
    %v1211 = vsub.f32 %v1076, %v827
    %v1212 = vsub.f32 %v1078, %v828
    %v1213 = vsub.f32 %v1080, %v829
    %v1214 = vsub.f32 %v1082, %v830
    %v1215 = vsub.f32 %v1084, %v831
    %v1216 = vsub.f32 %v1086, %v832
    %v1217 = vsub.f32 %v1088, %v833
    %v1218 = vsub.f32 %v1090, %v834
    %v1219 = vsub.f32 %v1091, 1.0
    %v1220 = vsub.f32 %v1092, 1.0
    %v1221 = vsub.f32 %v1093, 1.0
    %v1222 = vsub.f32 %v1094, 1.0
    %v1223 = vsub.f32 %v1095, 1.0
    %v1224 = vsub.f32 %v1096, 1.0
    %v1225 = vsub.f32 %v1097, 1.0
    %v1226 = vsub.f32 %v1098, 1.0
    %v1227 = vsub.f32 %v1099, 1.0
    %v1228 = vsub.f32 %v1100, 1.0
    %v1229 = vsub.f32 %v1101, 1.0
    %v1230 = vsub.f32 %v1102, 1.0
    %v1231 = vsub.f32 %v1103, 1.0
    %v1232 = vsub.f32 %v1104, 1.0
    %v1233 = vsub.f32 %v1105, 1.0
    %v1234 = vsub.f32 %v1106, 1.0
    %v1235 = vsub.f32 %v1107, 1.0
    %v1236 = vsub.f32 %v1108, 1.0
    %v1237 = vsub.f32 %v1109, 1.0
    %v1238 = vsub.f32 %v1110, 1.0
    %v1239 = vsub.f32 %v1111, 1.0
    %v1240 = vsub.f32 %v1112, 1.0
    %v1241 = vsub.f32 %v1113, 1.0
    %v1242 = vsub.f32 %v1114, 1.0
    %v1243 = vsub.f32 %v1115, 1.0
    %v1244 = vsub.f32 %v1116, 1.0
    %v1245 = vsub.f32 %v1117, 1.0
    %v1246 = vsub.f32 %v1118, 1.0
    %v1247 = vsub.f32 %v1119, 1.0
    %v1248 = vsub.f32 %v1120, 1.0
    %v1249 = vsub.f32 %v1121, 1.0
    %v1250 = vsub.f32 %v1122, 1.0
    %v1251 = vsub.f32 %v1123, 1.0
    %v1252 = vsub.f32 %v1124, 1.0
    %v1253 = vsub.f32 %v1125, 1.0
    %v1254 = vsub.f32 %v1126, 1.0
    %v1255 = vsub.f32 %v1127, 1.0
    %v1256 = vsub.f32 %v1128, 1.0
    %v1257 = vsub.f32 %v1129, 1.0
    %v1258 = vsub.f32 %v1130, 1.0
    %v1259 = vsub.f32 %v1131, 1.0
    %v1260 = vsub.f32 %v1132, 1.0
    %v1261 = vsub.f32 %v1133, 1.0
    %v1262 = vsub.f32 %v1134, 1.0
    %v1263 = vsub.f32 %v1135, 1.0
    %v1264 = vsub.f32 %v1136, 1.0
    %v1265 = vsub.f32 %v1137, 1.0
    %v1266 = vsub.f32 %v1138, 1.0
    %v1267 = vsub.f32 %v1139, 1.0
    %v1268 = vsub.f32 %v1140, 1.0
    %v1269 = vsub.f32 %v1141, 1.0
    %v1270 = vsub.f32 %v1142, 1.0
    %v1271 = vsub.f32 %v1143, 1.0
    %v1272 = vsub.f32 %v1144, 1.0
    %v1273 = vsub.f32 %v1145, 1.0
    %v1274 = vsub.f32 %v1146, 1.0
    %v1275 = vsub.f32 %v1147, 1.0
    %v1276 = vsub.f32 %v1148, 1.0
    %v1277 = vsub.f32 %v1149, 1.0
    %v1278 = vsub.f32 %v1150, 1.0
    %v1279 = vsub.f32 %v1151, 1.0
    %v1280 = vsub.f32 %v1152, 1.0
    %v1281 = vsub.f32 %v1153, 1.0
    %v1282 = vsub.f32 %v1154, 1.0
    %v1283 = vsub.f32 %v1155, 1.0
    %v1284 = vsub.f32 %v1156, 1.0
    %v1285 = vsub.f32 %v1157, 1.0
    %v1286 = vsub.f32 %v1158, 1.0
    %v1287 = vsub.f32 %v1159, 1.0
    %v1288 = vsub.f32 %v1160, 1.0
    %v1289 = vsub.f32 %v1161, 1.0
    %v1290 = vsub.f32 %v1162, 1.0
    %v1291 = vsub.f32 %v1163, 1.0
    %v1292 = vsub.f32 %v1164, 1.0
    %v1293 = vsub.f32 %v1165, 1.0
    %v1294 = vsub.f32 %v1166, 1.0
    %v1295 = vsub.f32 %v1167, 1.0
    %v1296 = vsub.f32 %v1168, 1.0
    %v1297 = vsub.f32 %v1169, 1.0
    %v1298 = vsub.f32 %v1170, 1.0
    %v1299 = vsub.f32 %v1171, 1.0
    %v1300 = vsub.f32 %v1172, 1.0
    %v1301 = vsub.f32 %v1173, 1.0
    %v1302 = vsub.f32 %v1174, 1.0
    %v1303 = vsub.f32 %v1175, 1.0
    %v1304 = vsub.f32 %v1176, 1.0
    %v1305 = vsub.f32 %v1177, 1.0
    %v1306 = vsub.f32 %v1178, 1.0
    %v1307 = vsub.f32 %v1179, 1.0
    %v1308 = vsub.f32 %v1180, 1.0
    %v1309 = vsub.f32 %v1181, 1.0
    %v1310 = vsub.f32 %v1182, 1.0
    %v1311 = vsub.f32 %v1183, 1.0
    %v1312 = vsub.f32 %v1184, 1.0
    %v1313 = vsub.f32 %v1185, 1.0
    %v1314 = vsub.f32 %v1186, 1.0
    %v1315 = vsub.f32 %v1187, 1.0
    %v1316 = vsub.f32 %v1188, 1.0
    %v1317 = vsub.f32 %v1189, 1.0
    %v1318 = vsub.f32 %v1190, 1.0
    %v1319 = vsub.f32 %v1191, 1.0
    %v1320 = vsub.f32 %v1192, 1.0
    %v1321 = vsub.f32 %v1193, 1.0
    %v1322 = vsub.f32 %v1194, 1.0
    %v1323 = vsub.f32 %v1195, 1.0
    %v1324 = vsub.f32 %v1196, 1.0
    %v1325 = vsub.f32 %v1197, 1.0
    %v1326 = vsub.f32 %v1198, 1.0
    %v1327 = vsub.f32 %v1199, 1.0
    %v1328 = vsub.f32 %v1200, 1.0
    %v1329 = vsub.f32 %v1201, 1.0
    %v1330 = vsub.f32 %v1202, 1.0
    %v1331 = vsub.f32 %v1203, 1.0
    %v1332 = vsub.f32 %v1204, 1.0
    %v1333 = vsub.f32 %v1205, 1.0
    %v1334 = vsub.f32 %v1206, 1.0
    %v1335 = vsub.f32 %v1207, 1.0
    %v1336 = vsub.f32 %v1208, 1.0
    %v1337 = vsub.f32 %v1209, 1.0
    %v1338 = vsub.f32 %v1210, 1.0
    %v1339 = vsub.f32 %v1211, 1.0
    %v1340 = vsub.f32 %v1212, 1.0
    %v1341 = vsub.f32 %v1213, 1.0
    %v1342 = vsub.f32 %v1214, 1.0
    %v1343 = vsub.f32 %v1215, 1.0
    %v1344 = vsub.f32 %v1216, 1.0
    %v1345 = vsub.f32 %v1217, 1.0
    %v1346 = vsub.f32 %v1218, 1.0
    %v1347 = vmul.f32 %v1219, 0.5
    %v1348 = vmul.f32 %v1220, 0.5
    %v1349 = vmul.f32 %v1221, 0.5
    %v1350 = vmul.f32 %v1222, 0.5
    %v1351 = vmul.f32 %v1223, 0.5
    %v1352 = vmul.f32 %v1224, 0.5
    %v1353 = vmul.f32 %v1225, 0.5
    %v1354 = vmul.f32 %v1226, 0.5
    %v1355 = vmul.f32 %v1227, 0.5
    %v1356 = vmul.f32 %v1228, 0.5
    %v1357 = vmul.f32 %v1229, 0.5
    %v1358 = vmul.f32 %v1230, 0.5
    %v1359 = vmul.f32 %v1231, 0.5
    %v1360 = vmul.f32 %v1232, 0.5
    %v1361 = vmul.f32 %v1233, 0.5
    %v1362 = vmul.f32 %v1234, 0.5
    %v1363 = vmul.f32 %v1235, 0.5
    %v1364 = vmul.f32 %v1236, 0.5
    %v1365 = vmul.f32 %v1237, 0.5
    %v1366 = vmul.f32 %v1238, 0.5
    %v1367 = vmul.f32 %v1239, 0.5
    %v1368 = vmul.f32 %v1240, 0.5
    %v1369 = vmul.f32 %v1241, 0.5
    %v1370 = vmul.f32 %v1242, 0.5
    %v1371 = vmul.f32 %v1243, 0.5
    %v1372 = vmul.f32 %v1244, 0.5
    %v1373 = vmul.f32 %v1245, 0.5
    %v1374 = vmul.f32 %v1246, 0.5
    %v1375 = vmul.f32 %v1247, 0.5
    %v1376 = vmul.f32 %v1248, 0.5
    %v1377 = vmul.f32 %v1249, 0.5
    %v1378 = vmul.f32 %v1250, 0.5
    %v1379 = vmul.f32 %v1251, 0.5
    %v1380 = vmul.f32 %v1252, 0.5
    %v1381 = vmul.f32 %v1253, 0.5
    %v1382 = vmul.f32 %v1254, 0.5
    %v1383 = vmul.f32 %v1255, 0.5
    %v1384 = vmul.f32 %v1256, 0.5
    %v1385 = vmul.f32 %v1257, 0.5
    %v1386 = vmul.f32 %v1258, 0.5
    %v1387 = vmul.f32 %v1259, 0.5
    %v1388 = vmul.f32 %v1260, 0.5
    %v1389 = vmul.f32 %v1261, 0.5
    %v1390 = vmul.f32 %v1262, 0.5
    %v1391 = vmul.f32 %v1263, 0.5
    %v1392 = vmul.f32 %v1264, 0.5
    %v1393 = vmul.f32 %v1265, 0.5
    %v1394 = vmul.f32 %v1266, 0.5
    %v1395 = vmul.f32 %v1267, 0.5
    %v1396 = vmul.f32 %v1268, 0.5
    %v1397 = vmul.f32 %v1269, 0.5
    %v1398 = vmul.f32 %v1270, 0.5
    %v1399 = vmul.f32 %v1271, 0.5
    %v1400 = vmul.f32 %v1272, 0.5
    %v1401 = vmul.f32 %v1273, 0.5
    %v1402 = vmul.f32 %v1274, 0.5
    %v1403 = vmul.f32 %v1275, 0.5
    %v1404 = vmul.f32 %v1276, 0.5
    %v1405 = vmul.f32 %v1277, 0.5
    %v1406 = vmul.f32 %v1278, 0.5
    %v1407 = vmul.f32 %v1279, 0.5
    %v1408 = vmul.f32 %v1280, 0.5
    %v1409 = vmul.f32 %v1281, 0.5
    %v1410 = vmul.f32 %v1282, 0.5
    %v1411 = vmul.f32 %v1283, 0.5
    %v1412 = vmul.f32 %v1284, 0.5
    %v1413 = vmul.f32 %v1285, 0.5
    %v1414 = vmul.f32 %v1286, 0.5
    %v1415 = vmul.f32 %v1287, 0.5
    %v1416 = vmul.f32 %v1288, 0.5
    %v1417 = vmul.f32 %v1289, 0.5
    %v1418 = vmul.f32 %v1290, 0.5
    %v1419 = vmul.f32 %v1291, 0.5
    %v1420 = vmul.f32 %v1292, 0.5
    %v1421 = vmul.f32 %v1293, 0.5
    %v1422 = vmul.f32 %v1294, 0.5
    %v1423 = vmul.f32 %v1295, 0.5
    %v1424 = vmul.f32 %v1296, 0.5
    %v1425 = vmul.f32 %v1297, 0.5
    %v1426 = vmul.f32 %v1298, 0.5
    %v1427 = vmul.f32 %v1299, 0.5
    %v1428 = vmul.f32 %v1300, 0.5
    %v1429 = vmul.f32 %v1301, 0.5
    %v1430 = vmul.f32 %v1302, 0.5
    %v1431 = vmul.f32 %v1303, 0.5
    %v1432 = vmul.f32 %v1304, 0.5
    %v1433 = vmul.f32 %v1305, 0.5
    %v1434 = vmul.f32 %v1306, 0.5
    %v1435 = vmul.f32 %v1307, 0.5
    %v1436 = vmul.f32 %v1308, 0.5
    %v1437 = vmul.f32 %v1309, 0.5
    %v1438 = vmul.f32 %v1310, 0.5
    %v1439 = vmul.f32 %v1311, 0.5
    %v1440 = vmul.f32 %v1312, 0.5
    %v1441 = vmul.f32 %v1313, 0.5
    %v1442 = vmul.f32 %v1314, 0.5
    %v1443 = vmul.f32 %v1315, 0.5
    %v1444 = vmul.f32 %v1316, 0.5
    %v1445 = vmul.f32 %v1317, 0.5
    %v1446 = vmul.f32 %v1318, 0.5
    %v1447 = vmul.f32 %v1319, 0.5
    %v1448 = vmul.f32 %v1320, 0.5
    %v1449 = vmul.f32 %v1321, 0.5
    %v1450 = vmul.f32 %v1322, 0.5
    %v1451 = vmul.f32 %v1323, 0.5
    %v1452 = vmul.f32 %v1324, 0.5
    %v1453 = vmul.f32 %v1325, 0.5
    %v1454 = vmul.f32 %v1326, 0.5
    %v1455 = vmul.f32 %v1327, 0.5
    %v1456 = vmul.f32 %v1328, 0.5
    %v1457 = vmul.f32 %v1329, 0.5
    %v1458 = vmul.f32 %v1330, 0.5
    %v1459 = vmul.f32 %v1331, 0.5
    %v1460 = vmul.f32 %v1332, 0.5
    %v1461 = vmul.f32 %v1333, 0.5
    %v1462 = vmul.f32 %v1334, 0.5
    %v1463 = vmul.f32 %v1335, 0.5
    %v1464 = vmul.f32 %v1336, 0.5
    %v1465 = vmul.f32 %v1337, 0.5
    %v1466 = vmul.f32 %v1338, 0.5
    %v1467 = vmul.f32 %v1339, 0.5
    %v1468 = vmul.f32 %v1340, 0.5
    %v1469 = vmul.f32 %v1341, 0.5
    %v1470 = vmul.f32 %v1342, 0.5
    %v1471 = vmul.f32 %v1343, 0.5
    %v1472 = vmul.f32 %v1344, 0.5
    %v1473 = vmul.f32 %v1345, 0.5
    %v1474 = vmul.f32 %v1346, 0.5
    %v1475 = vld [vmem:[#allocation7] sm:$0xf]
    %v1476 = vadd.f32 %v1347, %v1351
    %v1477 = vadd.f32 %v1476, %v1355
    %v1478 = vadd.f32 %v1477, %v1359
    %v1479 = vadd.f32 %v1478, %v1363
    %v1480 = vadd.f32 %v1479, %v1367
    %v1481 = vadd.f32 %v1480, %v1371
    %v1482 = vadd.f32 %v1481, %v1375
    %v1483 = vadd.f32 %v1482, %v1379
    %v1484 = vadd.f32 %v1483, %v1383
    %v1485 = vadd.f32 %v1484, %v1387
    %v1486 = vadd.f32 %v1485, %v1391
    %v1487 = vadd.f32 %v1486, %v1395
    %v1488 = vadd.f32 %v1487, %v1399
    %v1489 = vadd.f32 %v1488, %v1403
    %v1490 = vadd.f32 %v1489, %v1407
    %v1491 = vadd.f32 %v1490, %v1411
    %v1492 = vadd.f32 %v1491, %v1415
    %v1493 = vadd.f32 %v1492, %v1419
    %v1494 = vadd.f32 %v1493, %v1423
    %v1495 = vadd.f32 %v1494, %v1427
    %v1496 = vadd.f32 %v1495, %v1431
    %v1497 = vadd.f32 %v1496, %v1435
    %v1498 = vadd.f32 %v1497, %v1439
    %v1499 = vadd.f32 %v1498, %v1443
    %v1500 = vadd.f32 %v1499, %v1447
    %v1501 = vadd.f32 %v1500, %v1451
    %v1502 = vadd.f32 %v1501, %v1455
    %v1503 = vadd.f32 %v1502, %v1459
    %v1504 = vadd.f32 %v1503, %v1463
    %v1505 = vadd.f32 %v1504, %v1467
    %v1506 = vadd.f32 %v1505, %v1471
    %v1507 = vrot.slane %v1506, 4
    %v1508 = vadd.f32 %v1506, %v1507
    %v1509 = vrot.slane %v1508, 2
    %v1510 = vadd.f32 %v1508, %v1509
    %v1511 = vrot.slane %v1510, 1
    %v1512 = vadd.f32 %v1510, %v1511
    %v1513 = vadd.f32 %v1348, %v1352
    %v1514 = vadd.f32 %v1513, %v1356
    %v1515 = vadd.f32 %v1514, %v1360
    %v1516 = vadd.f32 %v1515, %v1364
    %v1517 = vadd.f32 %v1516, %v1368
    %v1518 = vadd.f32 %v1517, %v1372
    %v1519 = vadd.f32 %v1518, %v1376
    %v1520 = vadd.f32 %v1519, %v1380
    %v1521 = vadd.f32 %v1520, %v1384
    %v1522 = vadd.f32 %v1521, %v1388
    %v1523 = vadd.f32 %v1522, %v1392
    %v1524 = vadd.f32 %v1523, %v1396
    %v1525 = vadd.f32 %v1524, %v1400
    %v1526 = vadd.f32 %v1525, %v1404
    %v1527 = vadd.f32 %v1526, %v1408
    %v1528 = vadd.f32 %v1527, %v1412
    %v1529 = vadd.f32 %v1528, %v1416
    %v1530 = vadd.f32 %v1529, %v1420
    %v1531 = vadd.f32 %v1530, %v1424
    %v1532 = vadd.f32 %v1531, %v1428
    %v1533 = vadd.f32 %v1532, %v1432
    %v1534 = vadd.f32 %v1533, %v1436
    %v1535 = vadd.f32 %v1534, %v1440
    %v1536 = vadd.f32 %v1535, %v1444
    %v1537 = vadd.f32 %v1536, %v1448
    %v1538 = vadd.f32 %v1537, %v1452
    %v1539 = vadd.f32 %v1538, %v1456
    %v1540 = vadd.f32 %v1539, %v1460
    %v1541 = vadd.f32 %v1540, %v1464
    %v1542 = vadd.f32 %v1541, %v1468
    %v1543 = vadd.f32 %v1542, %v1472
    %v1544 = vrot.slane %v1543, 4
    %v1545 = vadd.f32 %v1543, %v1544
    %v1546 = vrot.slane %v1545, 2
    %v1547 = vadd.f32 %v1545, %v1546
    %v1548 = vrot.slane %v1547, 1
    %v1549 = vadd.f32 %v1547, %v1548
    %v1550 = vadd.f32 %v1349, %v1353
    %v1551 = vadd.f32 %v1550, %v1357
    %v1552 = vadd.f32 %v1551, %v1361
    %v1553 = vadd.f32 %v1552, %v1365
    %v1554 = vadd.f32 %v1553, %v1369
    %v1555 = vadd.f32 %v1554, %v1373
    %v1556 = vadd.f32 %v1555, %v1377
    %v1557 = vadd.f32 %v1556, %v1381
    %v1558 = vadd.f32 %v1557, %v1385
    %v1559 = vadd.f32 %v1558, %v1389
    %v1560 = vadd.f32 %v1559, %v1393
    %v1561 = vadd.f32 %v1560, %v1397
    %v1562 = vadd.f32 %v1561, %v1401
    %v1563 = vadd.f32 %v1562, %v1405
    %v1564 = vadd.f32 %v1563, %v1409
    %v1565 = vadd.f32 %v1564, %v1413
    %v1566 = vadd.f32 %v1565, %v1417
    %v1567 = vadd.f32 %v1566, %v1421
    %v1568 = vadd.f32 %v1567, %v1425
    %v1569 = vadd.f32 %v1568, %v1429
    %v1570 = vadd.f32 %v1569, %v1433
    %v1571 = vadd.f32 %v1570, %v1437
    %v1572 = vadd.f32 %v1571, %v1441
    %v1573 = vadd.f32 %v1572, %v1445
    %v1574 = vadd.f32 %v1573, %v1449
    %v1575 = vadd.f32 %v1574, %v1453
    %v1576 = vadd.f32 %v1575, %v1457
    %v1577 = vadd.f32 %v1576, %v1461
    %v1578 = vadd.f32 %v1577, %v1465
    %v1579 = vadd.f32 %v1578, %v1469
    %v1580 = vadd.f32 %v1579, %v1473
    %v1581 = vrot.slane %v1580, 4
    %v1582 = vadd.f32 %v1580, %v1581
    %v1583 = vrot.slane %v1582, 2
    %v1584 = vadd.f32 %v1582, %v1583
    %v1585 = vrot.slane %v1584, 1
    %v1586 = vadd.f32 %v1584, %v1585
    %v1587 = vadd.f32 %v1350, %v1354
    %v1588 = vadd.f32 %v1587, %v1358
    %v1589 = vadd.f32 %v1588, %v1362
    %v1590 = vadd.f32 %v1589, %v1366
    %v1591 = vadd.f32 %v1590, %v1370
    %v1592 = vadd.f32 %v1591, %v1374
    %v1593 = vadd.f32 %v1592, %v1378
    %v1594 = vadd.f32 %v1593, %v1382
    %v1595 = vadd.f32 %v1594, %v1386
    %v1596 = vadd.f32 %v1595, %v1390
    %v1597 = vadd.f32 %v1596, %v1394
    %v1598 = vadd.f32 %v1597, %v1398
    %v1599 = vadd.f32 %v1598, %v1402
    %v1600 = vadd.f32 %v1599, %v1406
    %v1601 = vadd.f32 %v1600, %v1410
    %v1602 = vadd.f32 %v1601, %v1414
    %v1603 = vadd.f32 %v1602, %v1418
    %v1604 = vadd.f32 %v1603, %v1422
    %v1605 = vadd.f32 %v1604, %v1426
    %v1606 = vadd.f32 %v1605, %v1430
    %v1607 = vadd.f32 %v1606, %v1434
    %v1608 = vadd.f32 %v1607, %v1438
    %v1609 = vadd.f32 %v1608, %v1442
    %v1610 = vadd.f32 %v1609, %v1446
    %v1611 = vadd.f32 %v1610, %v1450
    %v1612 = vadd.f32 %v1611, %v1454
    %v1613 = vadd.f32 %v1612, %v1458
    %v1614 = vadd.f32 %v1613, %v1462
    %v1615 = vadd.f32 %v1614, %v1466
    %v1616 = vadd.f32 %v1615, %v1470
    %v1617 = vadd.f32 %v1616, %v1474
    %v1618 = vrot.slane %v1617, 4
    %v1619 = vadd.f32 %v1617, %v1618
    %v1620 = vrot.slane %v1619, 2
    %v1621 = vadd.f32 %v1619, %v1620
    %v1622 = vrot.slane %v1621, 1
    %v1623 = vadd.f32 %v1621, %v1622
    %v1628 = vrot.slane %v1549, 7
    %v1629 = vrot.slane %v1586, 6
    %v1630 = vrot.slane %v1623, 5
    %vm1631 = vcmask 1040384
    %v1632 = vsel %vm1631, %v1512, %v1628
    %vm1633 = vcmask 1042434
    %v1634 = vsel %vm1633, %v1629, %v1630
    %vm1635 = vcmask 1041408
    %v1636 = vsel %vm1635, %v1632, %v1634
    %v1638 = vadd.f32 %v1475, %v1636
    %v1639 = vlaneseq
    %vm1640 = vcmp.ge.s32.totalorder %v1639, 0
    %vm1641 = vcmp.lt.s32.totalorder %v1639, 512
    %vm1642 = vmand %vm1640, %vm1641
    %1643 = vst.msk [vmem:[#allocation7] sm:$0xf] %vm1642, %v1638
    // Predicated region
    $region22: #{tpu_custom_call.1} parent=1 // pred_check
      _
    $region23: #{tpu_custom_call.1} parent=1 // pred_check_branch
      %1645 = sbr.rel (0) target = $region25
    $region24: #{tpu_custom_call.1} parent=1 // pred_region
      %1647 = vsyncadd [#allocation4], 0
      %s1649 = sshll.u32 [#allocation7], 4
      %s1650 = int_to_ptr.vmem [resolvable:$true] %s1649
      %s1651 = sshll.u32 %s2, 4
      %s1652 = int_to_ptr.hbm [resolvable:$true] %s1651
      %1654 = dma.vmem_to_hbm [thread:$0]  %s1650, 64, %s1652, [#allocation4]
    $region25: #{tpu_custom_call.1} parent=1 // pred_fallthru
      _
    // Predicated region
    $region26: #{tpu_custom_call.1} parent=1 // pred_check
      _
    $region27: #{tpu_custom_call.1} parent=1 // pred_check_branch
      %1656 = sbr.rel (0) target = $region29
    $region28: #{tpu_custom_call.1} parent=1 // pred_region
      %1658 = dma.done [#allocation4], 64
    $region29: #{tpu_custom_call.1} parent=1 // pred_fallthru
      _
    %1659 = vsyncpa [#allocation3], 1
    %1660 = vsyncpa [#allocation6], 1
    %1661 = vsyncpa [#allocation4], 1

</llo_original>
